<compile_context>
chip_gen: v7x
topology: tpu7x:2x2x1
jax: 0.10.0
libtpu: 0.0.40
codegen_flags: <defaults>
</compile_context>

<pallas_src>
import jax
import jax.numpy as jnp
from jax.experimental import pallas as pl
from jax.experimental.pallas import tpu as pltpu


def _round_up(x, m):
    return (x + m - 1) // m * m


# --------------------------------------------------------------------------
# Kernel 1: per-head Q / K / V projections (lane-dense, padded head_dim).
#   grid = (node_tile i, head h)
#   q_all[h, rows(i), :] = x[rows(i)] @ Wq_h + bq_h          (Wq_h pre-scaled)
# --------------------------------------------------------------------------
def _qkv_proj_kernel(x_ref, wq_ref, bq_ref, wk_ref, bk_ref, wv_ref, bv_ref,
                     q_ref, k_ref, v_ref):
    x = x_ref[...]                                            # [Tn, Dp] bf16
    q = jnp.dot(x, wq_ref[...], preferred_element_type=jnp.float32) + bq_ref[...]
    k = jnp.dot(x, wk_ref[...], preferred_element_type=jnp.float32) + bk_ref[...]
    v = jnp.dot(x, wv_ref[...], preferred_element_type=jnp.float32) + bv_ref[...]
    q_ref[...] = q.astype(q_ref.dtype)
    k_ref[...] = k.astype(k_ref.dtype)
    v_ref[...] = v.astype(v_ref.dtype)


# --------------------------------------------------------------------------
# Kernel 2: flash-style edge softmax + aggregation + output projection.
#   grid = (dst_tile i  [parallel], head h [arbitrary], src_tile s [arbitrary])
#   scores[v, u] = dot(K[v], Q[u])   (Q at source node, K at destination node)
#   online softmax over src tiles; isolated destinations produce zero.
#   y[rows(i)] = bo + sum_h normalize(acc_h) @ Wo_h
# --------------------------------------------------------------------------
def _attn_kernel(k_ref, q_ref, v_ref, adj_ref, wo_ref, bo_ref, o_ref,
                 m_sc, l_sc, acc_sc):
    h = pl.program_id(1)
    s = pl.program_id(2)
    n_src = pl.num_programs(2)

    # Initialize the resident output tile with the output bias once per dst tile.
    @pl.when(jnp.logical_and(h == 0, s == 0))
    def _():
        o_ref[...] = jnp.broadcast_to(bo_ref[...], o_ref.shape)

    # Reset the online-softmax state at the start of every (dst tile, head).
    @pl.when(s == 0)
    def _():
        m_sc[...] = jnp.full_like(m_sc, -jnp.inf)
        l_sc[...] = jnp.zeros_like(l_sc)
        acc_sc[...] = jnp.zeros_like(acc_sc)

    # scores[v, u] = dot(k[v], q[u]); scale already folded into q.
    scores = jax.lax.dot_general(
        k_ref[...], q_ref[...],
        dimension_numbers=(((1,), (1,)), ((), ())),
        preferred_element_type=jnp.float32)                   # [Tdst, Tsrc] f32

    mask = adj_ref[...].astype(jnp.float32) > 0.0             # int8 adjacency -> bool
    neg = jnp.float32(-1e30)
    scores = jnp.where(mask, scores, neg)

    m_prev = m_sc[...]
    m_new = jnp.maximum(m_prev, jnp.max(scores, axis=-1, keepdims=True))
    alpha = jnp.exp(m_prev - m_new)
    p = jnp.where(mask, jnp.exp(scores - m_new), 0.0)

    l_sc[...] = alpha * l_sc[...] + jnp.sum(p, axis=-1, keepdims=True)
    acc_sc[...] = alpha * acc_sc[...] + jnp.dot(
        p.astype(v_ref.dtype), v_ref[...], preferred_element_type=jnp.float32)
    m_sc[...] = m_new

    # After the last src tile: normalize the small per-head accumulator once and
    # accumulate its output projection into the lane-dense output block.
    @pl.when(s == n_src - 1)
    def _():
        l = l_sc[...]
        l = jnp.where(l == 0.0, 1.0, l)        # destinations with no in-edges -> 0
        out_h = acc_sc[...] * pl.reciprocal(l, approx=True)   # [Tdst, hdp] f32
        o_ref[...] += jnp.dot(out_h.astype(wo_ref.dtype), wo_ref[...],
                              preferred_element_type=jnp.float32)


# --------------------------------------------------------------------------
# Wrapper: pad / per-head slab the parameters, run the two kernels.
# --------------------------------------------------------------------------
def transformer_attention_pallas(x, adj, params, num_heads, *, tile_n=128):
    N, D = x.shape
    H = num_heads
    hd = D // H

    Dp = _round_up(D, 128)       # lane-dense hidden dim
    hdp = _round_up(hd, 128)     # lane-dense / >=128-deep contraction head dim
    Tn = tile_n
    Np = _round_up(N, Tn)
    n_tiles = Np // Tn

    f32, bf16 = jnp.float32, jnp.bfloat16
    scale = 1.0 / (hd ** 0.5)

    # ---- one-time parameter prep: per-head slabs, zero padding, scale fold ----
    def head_split_cols(w):          # [D, D] -> [H, D(in), hd]
        return jnp.transpose(w.reshape(D, H, hd), (1, 0, 2))

    def pad_w(w):                    # [H, D, hd] -> [H, Dp, hdp]
        return jnp.pad(w, ((0, 0), (0, Dp - D), (0, hdp - hd)))

    def pad_b(b):                    # [1, D] -> [H, 1, hdp]
        bh = jnp.transpose(b.reshape(1, H, hd), (1, 0, 2))
        return jnp.pad(bh, ((0, 0), (0, 0), (0, hdp - hd)))

    wq_h = pad_w(head_split_cols(params['wq']) * scale).astype(bf16)
    wk_h = pad_w(head_split_cols(params['wk'])).astype(bf16)
    wv_h = pad_w(head_split_cols(params['wv'])).astype(bf16)
    bq_h = (pad_b(params['bq']) * scale).astype(f32)
    bk_h = pad_b(params['bk']).astype(f32)
    bv_h = pad_b(params['bv']).astype(f32)

    # Output projection: split the *input* dim per head: [D, D] -> [H, hdp, Dp].
    wo_h = jnp.pad(params['wo'].reshape(H, hd, D),
                   ((0, 0), (0, hdp - hd), (0, Dp - D))).astype(bf16)
    bo = jnp.pad(params['bo'], ((0, 0), (0, Dp - D))).astype(f32)

    x_p = jnp.pad(x, ((0, Np - N), (0, Dp - D))).astype(bf16)
    adj_p = jnp.pad(adj, ((0, Np - N), (0, Np - N))).astype(jnp.int8)

    # ---- kernel 1: Q/K/V projections ----
    qkv_shape = jax.ShapeDtypeStruct((H, Np, hdp), bf16)
    qkv_grid = pltpu.PrefetchScalarGridSpec(
        num_scalar_prefetch=0,
        grid=(n_tiles, H),
        in_specs=[
            pl.BlockSpec((Tn, Dp), lambda i, h: (i, 0)),            # x rows
            pl.BlockSpec((None, Dp, hdp), lambda i, h: (h, 0, 0)),  # Wq_h
            pl.BlockSpec((None, 1, hdp), lambda i, h: (h, 0, 0)),   # bq_h
            pl.BlockSpec((None, Dp, hdp), lambda i, h: (h, 0, 0)),  # Wk_h
            pl.BlockSpec((None, 1, hdp), lambda i, h: (h, 0, 0)),   # bk_h
            pl.BlockSpec((None, Dp, hdp), lambda i, h: (h, 0, 0)),  # Wv_h
            pl.BlockSpec((None, 1, hdp), lambda i, h: (h, 0, 0)),   # bv_h
        ],
        out_specs=[
            pl.BlockSpec((None, Tn, hdp), lambda i, h: (h, i, 0)),
            pl.BlockSpec((None, Tn, hdp), lambda i, h: (h, i, 0)),
            pl.BlockSpec((None, Tn, hdp), lambda i, h: (h, i, 0)),
        ],
    )
    q_all, k_all, v_all = pl.pallas_call(
        _qkv_proj_kernel,
        out_shape=(qkv_shape, qkv_shape, qkv_shape),
        grid_spec=qkv_grid,
        compiler_params=pltpu.CompilerParams(
            dimension_semantics=("parallel", "parallel")),
        cost_estimate=pl.CostEstimate(
            flops=2 * 3 * Np * Dp * H * hdp,
            transcendentals=0,
            bytes_accessed=(Np * Dp + 3 * H * Dp * hdp + 3 * H * Np * hdp) * 2),
    )(x_p, wq_h, bq_h, wk_h, bk_h, wv_h, bv_h)

    # ---- kernel 2: flash-style edge softmax + aggregation + output proj ----
    attn_grid = pltpu.PrefetchScalarGridSpec(
        num_scalar_prefetch=0,
        grid=(n_tiles, H, n_tiles),
        in_specs=[
            pl.BlockSpec((None, Tn, hdp), lambda i, h, s: (h, i, 0)),  # K (dst rows)
            pl.BlockSpec((None, Tn, hdp), lambda i, h, s: (h, s, 0)),  # Q (src rows)
            pl.BlockSpec((None, Tn, hdp), lambda i, h, s: (h, s, 0)),  # V (src rows)
            pl.BlockSpec((Tn, Tn), lambda i, h, s: (i, s)),            # adj[dst, src]
            pl.BlockSpec((None, hdp, Dp), lambda i, h, s: (h, 0, 0)),  # Wo_h
            pl.BlockSpec((1, Dp), lambda i, h, s: (0, 0)),             # bo
        ],
        out_specs=pl.BlockSpec((Tn, Dp), lambda i, h, s: (i, 0)),
        scratch_shapes=[
            pltpu.VMEM((Tn, 1), jnp.float32),      # running max m
            pltpu.VMEM((Tn, 1), jnp.float32),      # running sum l
            pltpu.VMEM((Tn, hdp), jnp.float32),    # per-head accumulator
        ],
    )
    y_p = pl.pallas_call(
        _attn_kernel,
        out_shape=jax.ShapeDtypeStruct((Np, Dp), jnp.float32),
        grid_spec=attn_grid,
        compiler_params=pltpu.CompilerParams(
            dimension_semantics=("parallel", "arbitrary", "arbitrary"),
            vmem_limit_bytes=32 * 1024 * 1024),
        cost_estimate=pl.CostEstimate(
            flops=4 * H * Np * Np * hdp + 2 * H * Np * hdp * Dp,
            transcendentals=H * Np * Np,
            bytes_accessed=Np * Np + (3 * H * Np * hdp + H * hdp * Dp) * 2
            + Np * Dp * 4),
    )(k_all, q_all, v_all, adj_p, wo_h, bo)

    return y_p[:N, :D]


# --------------------------------------------------------------------------
# Pure-JAX f32 reference (mirrors the PyTorch module semantics).
# --------------------------------------------------------------------------
def ref_forward(x, adj, params, num_heads):
    N, D = x.shape
    hd = D // num_heads
    q = (x @ params['wq'] + params['bq']).reshape(N, num_heads, hd)
    k = (x @ params['wk'] + params['bk']).reshape(N, num_heads, hd)
    v = (x @ params['wv'] + params['bv']).reshape(N, num_heads, hd)
    scores = jnp.einsum('vhd,uhd->hvu', k, q) / (hd ** 0.5)
    mask = adj[None, :, :] > 0.0
    masked = jnp.where(mask, scores, -1e30)
    m = jnp.max(masked, axis=-1, keepdims=True)
    p = jnp.where(mask, jnp.exp(masked - m), 0.0)
    s = jnp.sum(p, axis=-1, keepdims=True)
    s = jnp.where(s == 0.0, 1.0, s)
    attn = p / s
    out = jnp.einsum('hvu,uhd->vhd', attn, v).reshape(N, D)
    return out @ params['wo'] + params['bo']


def init_params(key, dim):
    """Deterministic init matching nn.Linear shapes; weights stored as [in, out]."""
    ks = jax.random.split(key, 8)
    bound = 1.0 / (dim ** 0.5)

    def u(k, shape):
        return jax.random.uniform(k, shape, jnp.float32, minval=-bound, maxval=bound)

    return {
        'wq': u(ks[0], (dim, dim)), 'bq': u(ks[1], (1, dim)),
        'wk': u(ks[2], (dim, dim)), 'bk': u(ks[3], (1, dim)),
        'wv': u(ks[4], (dim, dim)), 'bv': u(ks[5], (1, dim)),
        'wo': u(ks[6], (dim, dim)), 'bo': u(ks[7], (1, dim)),
    }


if __name__ == "__main__":
    N = 8           # number of graph nodes
    DIM = 32        # hidden dim
    NUM_HEADS = 4   # -> head_dim = 8
    DROPOUT = 0.1   # identity at inference

    key = jax.random.PRNGKey(0)
    kx, kadj, kp = jax.random.split(key, 3)

    x = jax.random.normal(kx, (N, DIM), dtype=jnp.float32)

    # Dense adjacency mask adj[dst, src]; ~40% edges plus self-loops so every
    # destination has at least one incoming edge.
    adj = (jax.random.uniform(kadj, (N, N)) < 0.4).astype(jnp.float32)
    adj = jnp.maximum(adj, jnp.eye(N, dtype=jnp.float32))

    params = init_params(kp, DIM)

    y = transformer_attention_pallas(x, adj, params, NUM_HEADS)
    y = jax.block_until_ready(y)

    y_ref = ref_forward(x, adj, params, NUM_HEADS)
    max_err = float(jnp.max(jnp.abs(y - y_ref)))
    # bf16 matmuls + approx reciprocal vs f32 reference -> relaxed tolerance.
    assert jnp.allclose(y, y_ref, atol=2e-2, rtol=2e-2), (
        f"mismatch vs JAX reference (max abs err = {max_err})")

    print("KERNEL_OK")
</pallas_src>

<mosaic_0001>
module attributes {stable_mosaic.version = 11 : i64} {
  func.func @_qkv_proj_kernel(%arg0: i32, %arg1: i32, %arg2: memref<128x128xbf16, #tpu.memory_space<vmem>>, %arg3: memref<1x128x128xbf16, #tpu.memory_space<vmem>>, %arg4: memref<1x1x128xf32, #tpu.memory_space<vmem>>, %arg5: memref<1x128x128xbf16, #tpu.memory_space<vmem>>, %arg6: memref<1x1x128xf32, #tpu.memory_space<vmem>>, %arg7: memref<1x128x128xbf16, #tpu.memory_space<vmem>>, %arg8: memref<1x1x128xf32, #tpu.memory_space<vmem>>, %arg9: memref<1x128x128xbf16, #tpu.memory_space<vmem>>, %arg10: memref<1x128x128xbf16, #tpu.memory_space<vmem>>, %arg11: memref<1x128x128xbf16, #tpu.memory_space<vmem>>) attributes {dimension_semantics = [#tpu.dimension_semantics<parallel>, #tpu.dimension_semantics<parallel>], iteration_bounds = array<i64: 1, 4>, scalar_prefetch = 0 : i64, scratch_operands = 0 : i64, tpu.core_type = #tpu.core_type<tc>, window_params = [{transform_indices = @transform_0, window_bounds = array<i64: 128, 128>}, {transform_indices = @transform_1, window_bounds = array<i64: 1, 128, 128>}, {transform_indices = @transform_2, window_bounds = array<i64: 1, 1, 128>}, {transform_indices = @transform_3, window_bounds = array<i64: 1, 128, 128>}, {transform_indices = @transform_4, window_bounds = array<i64: 1, 1, 128>}, {transform_indices = @transform_5, window_bounds = array<i64: 1, 128, 128>}, {transform_indices = @transform_6, window_bounds = array<i64: 1, 1, 128>}, {transform_indices = @transform_7, window_bounds = array<i64: 1, 128, 128>}, {transform_indices = @transform_8, window_bounds = array<i64: 1, 128, 128>}, {transform_indices = @transform_9, window_bounds = array<i64: 1, 128, 128>}]} {
    %c0 = arith.constant 0 : index
    %c0_0 = arith.constant 0 : index
    %0 = vector.load %arg2[%c0, %c0_0] : memref<128x128xbf16, #tpu.memory_space<vmem>>, vector<128x128xbf16>
    %c0_1 = arith.constant 0 : index
    %c0_2 = arith.constant 0 : index
    %c0_3 = arith.constant 0 : index
    %1 = vector.load %arg3[%c0_1, %c0_2, %c0_3] : memref<1x128x128xbf16, #tpu.memory_space<vmem>>, vector<1x128x128xbf16>
    %2 = vector.shape_cast %1 : vector<1x128x128xbf16> to vector<128x128xbf16>
    %cst = arith.constant dense<0.000000e+00> : vector<128x128xf32>
    %3 = tpu.matmul %0, %2, %cst {dimension_numbers = #tpu.dot_dimension_numbers<[1], [0], [0], [1], [0, 0, 1, 1], [], []>} : vector<128x128xbf16>, vector<128x128xbf16>, vector<128x128xf32> -> vector<128x128xf32>
    %c0_4 = arith.constant 0 : index
    %c0_5 = arith.constant 0 : index
    %c0_6 = arith.constant 0 : index
    %4 = vector.load %arg4[%c0_4, %c0_5, %c0_6] : memref<1x1x128xf32, #tpu.memory_space<vmem>>, vector<1x1x128xf32>
    %5 = vector.shape_cast %4 : vector<1x1x128xf32> to vector<1x128xf32>
    %6 = vector.broadcast %5 : vector<1x128xf32> to vector<128x128xf32>
    %7 = arith.addf %3, %6 : vector<128x128xf32>
    %c0_7 = arith.constant 0 : index
    %c0_8 = arith.constant 0 : index
    %c0_9 = arith.constant 0 : index
    %8 = vector.load %arg5[%c0_7, %c0_8, %c0_9] : memref<1x128x128xbf16, #tpu.memory_space<vmem>>, vector<1x128x128xbf16>
    %9 = vector.shape_cast %8 : vector<1x128x128xbf16> to vector<128x128xbf16>
    %cst_10 = arith.constant dense<0.000000e+00> : vector<128x128xf32>
    %10 = tpu.matmul %0, %9, %cst_10 {dimension_numbers = #tpu.dot_dimension_numbers<[1], [0], [0], [1], [0, 0, 1, 1], [], []>} : vector<128x128xbf16>, vector<128x128xbf16>, vector<128x128xf32> -> vector<128x128xf32>
    %c0_11 = arith.constant 0 : index
    %c0_12 = arith.constant 0 : index
    %c0_13 = arith.constant 0 : index
    %11 = vector.load %arg6[%c0_11, %c0_12, %c0_13] : memref<1x1x128xf32, #tpu.memory_space<vmem>>, vector<1x1x128xf32>
    %12 = vector.shape_cast %11 : vector<1x1x128xf32> to vector<1x128xf32>
    %13 = vector.broadcast %12 : vector<1x128xf32> to vector<128x128xf32>
    %14 = arith.addf %10, %13 : vector<128x128xf32>
    %c0_14 = arith.constant 0 : index
    %c0_15 = arith.constant 0 : index
    %c0_16 = arith.constant 0 : index
    %15 = vector.load %arg7[%c0_14, %c0_15, %c0_16] : memref<1x128x128xbf16, #tpu.memory_space<vmem>>, vector<1x128x128xbf16>
    %16 = vector.shape_cast %15 : vector<1x128x128xbf16> to vector<128x128xbf16>
    %cst_17 = arith.constant dense<0.000000e+00> : vector<128x128xf32>
    %17 = tpu.matmul %0, %16, %cst_17 {dimension_numbers = #tpu.dot_dimension_numbers<[1], [0], [0], [1], [0, 0, 1, 1], [], []>} : vector<128x128xbf16>, vector<128x128xbf16>, vector<128x128xf32> -> vector<128x128xf32>
    %c0_18 = arith.constant 0 : index
    %c0_19 = arith.constant 0 : index
    %c0_20 = arith.constant 0 : index
    %18 = vector.load %arg8[%c0_18, %c0_19, %c0_20] : memref<1x1x128xf32, #tpu.memory_space<vmem>>, vector<1x1x128xf32>
    %19 = vector.shape_cast %18 : vector<1x1x128xf32> to vector<1x128xf32>
    %20 = vector.broadcast %19 : vector<1x128xf32> to vector<128x128xf32>
    %21 = arith.addf %17, %20 : vector<128x128xf32>
    %22 = arith.truncf %7 : vector<128x128xf32> to vector<128x128xbf16>
    %c0_21 = arith.constant 0 : index
    %c0_22 = arith.constant 0 : index
    %c0_23 = arith.constant 0 : index
    %23 = vector.load %arg9[%c0_21, %c0_22, %c0_23] : memref<1x128x128xbf16, #tpu.memory_space<vmem>>, vector<1x128x128xbf16>
    %24 = vector.shape_cast %23 : vector<1x128x128xbf16> to vector<128x128xbf16>
    %25 = vector.shape_cast %22 : vector<128x128xbf16> to vector<1x128x128xbf16>
    tpu.vector_store %arg9[%c0_21, %c0_22, %c0_23], %25 {strides = array<i32>} : memref<1x128x128xbf16, #tpu.memory_space<vmem>>, vector<1x128x128xbf16>,
    %26 = arith.truncf %14 : vector<128x128xf32> to vector<128x128xbf16>
    %c0_24 = arith.constant 0 : index
    %c0_25 = arith.constant 0 : index
    %c0_26 = arith.constant 0 : index
    %27 = vector.load %arg10[%c0_24, %c0_25, %c0_26] : memref<1x128x128xbf16, #tpu.memory_space<vmem>>, vector<1x128x128xbf16>
    %28 = vector.shape_cast %27 : vector<1x128x128xbf16> to vector<128x128xbf16>
    %29 = vector.shape_cast %26 : vector<128x128xbf16> to vector<1x128x128xbf16>
    tpu.vector_store %arg10[%c0_24, %c0_25, %c0_26], %29 {strides = array<i32>} : memref<1x128x128xbf16, #tpu.memory_space<vmem>>, vector<1x128x128xbf16>,
    %30 = arith.truncf %21 : vector<128x128xf32> to vector<128x128xbf16>
    %c0_27 = arith.constant 0 : index
    %c0_28 = arith.constant 0 : index
    %c0_29 = arith.constant 0 : index
    %31 = vector.load %arg11[%c0_27, %c0_28, %c0_29] : memref<1x128x128xbf16, #tpu.memory_space<vmem>>, vector<1x128x128xbf16>
    %32 = vector.shape_cast %31 : vector<1x128x128xbf16> to vector<128x128xbf16>
    %33 = vector.shape_cast %30 : vector<128x128xbf16> to vector<1x128x128xbf16>
    tpu.vector_store %arg11[%c0_27, %c0_28, %c0_29], %33 {strides = array<i32>} : memref<1x128x128xbf16, #tpu.memory_space<vmem>>, vector<1x128x128xbf16>,
    return
  }
  func.func @transform_0(%arg0: i32, %arg1: i32) -> (i32, i32) {
    %c0_i32 = arith.constant 0 : i32
    %c0_i32_0 = arith.constant 0 : i32
    return %arg0, %c0_i32 : i32, i32
  }
  func.func @transform_1(%arg0: i32, %arg1: i32) -> (i32, i32, i32) {
    %c0_i32 = arith.constant 0 : i32
    %c0_i32_0 = arith.constant 0 : i32
    %c0_i32_1 = arith.constant 0 : i32
    return %arg1, %c0_i32, %c0_i32_0 : i32, i32, i32
  }
  func.func @transform_2(%arg0: i32, %arg1: i32) -> (i32, i32, i32) {
    %c0_i32 = arith.constant 0 : i32
    %c0_i32_0 = arith.constant 0 : i32
    %c0_i32_1 = arith.constant 0 : i32
    return %arg1, %c0_i32, %c0_i32_0 : i32, i32, i32
  }
  func.func @transform_3(%arg0: i32, %arg1: i32) -> (i32, i32, i32) {
    %c0_i32 = arith.constant 0 : i32
    %c0_i32_0 = arith.constant 0 : i32
    %c0_i32_1 = arith.constant 0 : i32
    return %arg1, %c0_i32, %c0_i32_0 : i32, i32, i32
  }
  func.func @transform_4(%arg0: i32, %arg1: i32) -> (i32, i32, i32) {
    %c0_i32 = arith.constant 0 : i32
    %c0_i32_0 = arith.constant 0 : i32
    %c0_i32_1 = arith.constant 0 : i32
    return %arg1, %c0_i32, %c0_i32_0 : i32, i32, i32
  }
  func.func @transform_5(%arg0: i32, %arg1: i32) -> (i32, i32, i32) {
    %c0_i32 = arith.constant 0 : i32
    %c0_i32_0 = arith.constant 0 : i32
    %c0_i32_1 = arith.constant 0 : i32
    return %arg1, %c0_i32, %c0_i32_0 : i32, i32, i32
  }
  func.func @transform_6(%arg0: i32, %arg1: i32) -> (i32, i32, i32) {
    %c0_i32 = arith.constant 0 : i32
    %c0_i32_0 = arith.constant 0 : i32
    %c0_i32_1 = arith.constant 0 : i32
    return %arg1, %c0_i32, %c0_i32_0 : i32, i32, i32
  }
  func.func @transform_7(%arg0: i32, %arg1: i32) -> (i32, i32, i32) {
    %c0_i32 = arith.constant 0 : i32
    %c0_i32_0 = arith.constant 0 : i32
    return %arg1, %arg0, %c0_i32 : i32, i32, i32
  }
  func.func @transform_8(%arg0: i32, %arg1: i32) -> (i32, i32, i32) {
    %c0_i32 = arith.constant 0 : i32
    %c0_i32_0 = arith.constant 0 : i32
    return %arg1, %arg0, %c0_i32 : i32, i32, i32
  }
  func.func @transform_9(%arg0: i32, %arg1: i32) -> (i32, i32, i32) {
    %c0_i32 = arith.constant 0 : i32
    %c0_i32_0 = arith.constant 0 : i32
    return %arg1, %arg0, %c0_i32 : i32, i32, i32
  }
}

</mosaic_0001>

<llo_original>
// kernel: tpu_custom_call.1
$region0: #{tpu_custom_call.1}
  #allocation0 [shape = 'u32[]', space=smem, size = 0x4, offset = 0x4, fixed_abs, tag = 'smem constant byte address 0x4 - core index']
  #allocation1 [shape = 'u32[144,128]{1,0:T(1,128)}', space=vmem, size = 0x12000, scoped, tag = 'internal scratch']
  %s0 = inlined_call_operand.hbm [shape: bf16[128,128], index: 0, kind: input, shape index: {}]
  %s1 = inlined_call_operand.hbm [shape: bf16[4,128,128], index: 1, kind: input, shape index: {}]
  %s2 = inlined_call_operand.vmem [shape: f32[4,1,128], index: 2, kind: input, shape index: {}]
  %s3 = inlined_call_operand.hbm [shape: bf16[4,128,128], index: 3, kind: input, shape index: {}]
  %s4 = inlined_call_operand.vmem [shape: f32[4,1,128], index: 4, kind: input, shape index: {}]
  %s5 = inlined_call_operand.hbm [shape: bf16[4,128,128], index: 5, kind: input, shape index: {}]
  %s6 = inlined_call_operand.vmem [shape: f32[4,1,128], index: 6, kind: input, shape index: {}]
  %s7 = inlined_call_operand.hbm [shape: bf16[4,128,128], index: 7, kind: output, shape index: {0}]
  %s8 = inlined_call_operand.hbm [shape: bf16[4,128,128], index: 8, kind: output, shape index: {1}]
  %s9 = inlined_call_operand.hbm [shape: bf16[4,128,128], index: 9, kind: output, shape index: {2}]
  %10 = xla_tuple %s7, %s8, %s9
  %s11 = sld [smem:[#allocation0]]
  $region93: #{tpu_custom_call.1} parent=0
    _
  %s13 = ssub.s32 1, %s11
  %s14 = scalar_select 0, %s13, %s11
  $region1: #{tpu_custom_call.1} parent=0
    #allocation2 [shape = 'u8[32768]{0}', space=vmem, size = 0x8000, scoped, tag = 'input window, operand 0, single buffered']
    #allocation3 [shape = 's32[2]{0}', space=sflag, size = 0x8, scoped, tag = 'scoped memory for tpu_custom_call.1']
    #allocation4 [shape = 's32[2]{0}', space=sflag, size = 0x8, scoped, tag = 'scoped memory for tpu_custom_call.1']
    #allocation5 [shape = 'u8[65536]{0}', space=vmem, size = 0x10000, scoped, tag = 'input window, operand 1']
    #allocation6 [shape = 's32[2]{0}', space=sflag, size = 0x8, scoped, tag = 'scoped memory for tpu_custom_call.1']
    #allocation7 [shape = 'u8[65536]{0}', space=vmem, size = 0x10000, scoped, tag = 'input window, operand 3']
    #allocation8 [shape = 'u8[65536]{0}', space=vmem, size = 0x10000, scoped, tag = 'input window, operand 5']
    #allocation9 [shape = 's32[2]{0}', space=sflag, size = 0x8, scoped, tag = 'scoped memory for tpu_custom_call.1']
    #allocation10 [shape = 'u8[65536]{0}', space=vmem, size = 0x10000, scoped, tag = 'output window, operand 0']
    #allocation11 [shape = 'u8[65536]{0}', space=vmem, size = 0x10000, scoped, tag = 'output window, operand 1']
    #allocation12 [shape = 's32[2]{0}', space=sflag, size = 0x8, scoped, tag = 'scoped memory for tpu_custom_call.1']
    #allocation13 [shape = 'u8[65536]{0}', space=vmem, size = 0x10000, scoped, tag = 'output window, operand 2']
    %15 = vsyncpa [#allocation3], 0
    %16 = vsyncpa [#allocation6], 0
    %s17 = scalar_lea.sflag [#allocation6], 1
    %18 = vsyncpa %s17, 0
    %19 = vsyncpa [#allocation9], 0
    %s20 = scalar_lea.sflag [#allocation9], 1
    %21 = vsyncpa %s20, 0
    %22 = vsyncpa [#allocation4], 0
    %s23 = scalar_lea.sflag [#allocation4], 1
    %24 = vsyncpa %s23, 0
    %25 = vsyncpa [#allocation12], 0
    %s26 = scalar_lea.sflag [#allocation12], 1
    %27 = vsyncpa %s26, 0
    loop: start=0, step=1, limit=6
    $region2: #{tpu_custom_call.1} parent=1 // loop_pre_header
      _
    $region3: #{tpu_custom_call.1} parent=1 // loop_header
      %s29 = sphi 0, %s33
      %p30 = scmp.ge.s32.totalorder %s29, 6
      %s36 = sphi 0, %s48
      %s37 = sphi 0, %s44
      %s38 = sphi 0, %s36
      %s39 = sphi 0, %s37
      %s40 = sphi 0, %s38
      %s41 = sphi 0, %s39
      %s51 = sphi 0, %s53
      %s54 = sphi 0, %s51
      %s55 = sphi 0, %s54
      %s71 = sphi 0, %s55
      %s77 = sphi 0, %s79
      %s80 = sphi 0, %s77
      %s81 = sphi 0, %s80
      %s97 = sphi 0, %s81
      %s103 = sphi 0, %s105
      %s106 = sphi 0, %s103
      %s107 = sphi 0, %s106
      %s123 = sphi 0, %s107
      %s129 = sphi 0, %s131
      %s132 = sphi 0, %s129
      %s133 = sphi 0, %s132
      %s149 = sphi 0, %s133
      %s155 = sphi 0, %s157
      %s158 = sphi 0, %s155
      %s159 = sphi 0, %s158
      %s175 = sphi 0, %s159
      %s181 = sphi 0, %s183
      %s184 = sphi 0, %s181
      %s185 = sphi 0, %s184
      %s201 = sphi 0, %s185
      %s207 = sphi 0, %s209
      %s210 = sphi 0, %s207
      %s211 = sphi 0, %s210
      %s227 = sphi 0, %s211
      %s235 = sphi 0, %s237
      %s238 = sphi 0, %s235
      %s239 = sphi 0, %s238
      %s255 = sphi 0, %s239
      %s263 = sphi 0, %s265
      %s266 = sphi 0, %s263
      %s267 = sphi 0, %s266
      %s283 = sphi 0, %s267
      %s291 = sphi 0, %s293
      %s294 = sphi 0, %s291
      %s295 = sphi 0, %s294
      %s311 = sphi 0, %s295
    $region4: #{tpu_custom_call.1} parent=1 // loop_header_branch
      %32 = sbr.rel (%p30) target = $region8
    $region5: #{tpu_custom_call.1} parent=1 // loop_body
      %s34 = ssub.s32 %s29, 1
      %s35 = ssub.s32 %s29, 2
      %s42 = sadd.s32 1, %s37
      %p43 = scmp.ge.s32.totalorder %s42, 4
      %s44 = scalar_select %p43, 0, %s42
      %s45 = sadd.s32 1, %s36
      %s46 = scalar_select %p43, %s45, %s36
      %p47 = scmp.ge.s32.totalorder %s46, 1
      %s48 = scalar_select %p47, 0, %s46
      %s49 = ssub.s32 %s36, %s48
      %p50 = scmp.eq.s32.totalorder %s49, 0
      %s52 = sadd.s32 %s51, 1
      %s53 = scalar_select %p50, %s51, %s52
      %p56 = pneg %p50
      %p57 = scmp.eq.s32.totalorder %s29, 3
      %p58 = por %p56, %p57
      %p59 = scmp.ne.s32.totalorder %s51, %s54
      %p60 = scmp.eq.s32.totalorder %s29, 0
      %p61 = por %p59, %p60
      %p62 = scmp.ne.s32.totalorder %s51, %s54
      %p63 = scmp.eq.s32.totalorder %s34, 3
      %p64 = por %p62, %p63
      %p65 = scmp.ne.s32.totalorder %s54, %s55
      %p66 = scmp.eq.s32.totalorder %s34, 0
      %p67 = por %p65, %p66
      %p68 = scmp.ne.s32.totalorder %s54, %s55
      %p69 = scmp.eq.s32.totalorder %s35, 3
      %p70 = por %p68, %p69
      %p72 = scmp.ne.s32.totalorder %s55, %s71
      %p73 = scmp.eq.s32.totalorder %s35, 0
      %p74 = por %p72, %p73
      %s75 = ssub.s32 %s37, %s44
      %p76 = scmp.eq.s32.totalorder %s75, 0
      %s78 = sadd.s32 %s77, 1
      %s79 = scalar_select %p76, %s77, %s78
      %p82 = pneg %p76
      %p83 = scmp.eq.s32.totalorder %s29, 3
      %p84 = por %p82, %p83
      %p85 = scmp.ne.s32.totalorder %s77, %s80
      %p86 = scmp.eq.s32.totalorder %s29, 0
      %p87 = por %p85, %p86
      %p88 = scmp.ne.s32.totalorder %s77, %s80
      %p89 = scmp.eq.s32.totalorder %s34, 3
      %p90 = por %p88, %p89
      %p91 = scmp.ne.s32.totalorder %s80, %s81
      %p92 = scmp.eq.s32.totalorder %s34, 0
      %p93 = por %p91, %p92
      %p94 = scmp.ne.s32.totalorder %s80, %s81
      %p95 = scmp.eq.s32.totalorder %s35, 3
      %p96 = por %p94, %p95
      %p98 = scmp.ne.s32.totalorder %s81, %s97
      %p99 = scmp.eq.s32.totalorder %s35, 0
      %p100 = por %p98, %p99
      %s101 = ssub.s32 %s37, %s44
      %p102 = scmp.eq.s32.totalorder %s101, 0
      %s104 = sadd.s32 %s103, 1
      %s105 = scalar_select %p102, %s103, %s104
      %p108 = pneg %p102
      %p109 = scmp.eq.s32.totalorder %s29, 3
      %p110 = por %p108, %p109
      %p111 = scmp.ne.s32.totalorder %s103, %s106
      %p112 = scmp.eq.s32.totalorder %s29, 0
      %p113 = por %p111, %p112
      %p114 = scmp.ne.s32.totalorder %s103, %s106
      %p115 = scmp.eq.s32.totalorder %s34, 3
      %p116 = por %p114, %p115
      %p117 = scmp.ne.s32.totalorder %s106, %s107
      %p118 = scmp.eq.s32.totalorder %s34, 0
      %p119 = por %p117, %p118
      %p120 = scmp.ne.s32.totalorder %s106, %s107
      %p121 = scmp.eq.s32.totalorder %s35, 3
      %p122 = por %p120, %p121
      %p124 = scmp.ne.s32.totalorder %s107, %s123
      %p125 = scmp.eq.s32.totalorder %s35, 0
      %p126 = por %p124, %p125
      %s127 = ssub.s32 %s37, %s44
      %p128 = scmp.eq.s32.totalorder %s127, 0
      %s130 = sadd.s32 %s129, 1
      %s131 = scalar_select %p128, %s129, %s130
      %p134 = pneg %p128
      %p135 = scmp.eq.s32.totalorder %s29, 3
      %p136 = por %p134, %p135
      %p137 = scmp.ne.s32.totalorder %s129, %s132
      %p138 = scmp.eq.s32.totalorder %s29, 0
      %p139 = por %p137, %p138
      %p140 = scmp.ne.s32.totalorder %s129, %s132
      %p141 = scmp.eq.s32.totalorder %s34, 3
      %p142 = por %p140, %p141
      %p143 = scmp.ne.s32.totalorder %s132, %s133
      %p144 = scmp.eq.s32.totalorder %s34, 0
      %p145 = por %p143, %p144
      %p146 = scmp.ne.s32.totalorder %s132, %s133
      %p147 = scmp.eq.s32.totalorder %s35, 3
      %p148 = por %p146, %p147
      %p150 = scmp.ne.s32.totalorder %s133, %s149
      %p151 = scmp.eq.s32.totalorder %s35, 0
      %p152 = por %p150, %p151
      %s153 = ssub.s32 %s37, %s44
      %p154 = scmp.eq.s32.totalorder %s153, 0
      %s156 = sadd.s32 %s155, 1
      %s157 = scalar_select %p154, %s155, %s156
      %p160 = pneg %p154
      %p161 = scmp.eq.s32.totalorder %s29, 3
      %p162 = por %p160, %p161
      %p163 = scmp.ne.s32.totalorder %s155, %s158
      %p164 = scmp.eq.s32.totalorder %s29, 0
      %p165 = por %p163, %p164
      %p166 = scmp.ne.s32.totalorder %s155, %s158
      %p167 = scmp.eq.s32.totalorder %s34, 3
      %p168 = por %p166, %p167
      %p169 = scmp.ne.s32.totalorder %s158, %s159
      %p170 = scmp.eq.s32.totalorder %s34, 0
      %p171 = por %p169, %p170
      %p172 = scmp.ne.s32.totalorder %s158, %s159
      %p173 = scmp.eq.s32.totalorder %s35, 3
      %p174 = por %p172, %p173
      %p176 = scmp.ne.s32.totalorder %s159, %s175
      %p177 = scmp.eq.s32.totalorder %s35, 0
      %p178 = por %p176, %p177
      %s179 = ssub.s32 %s37, %s44
      %p180 = scmp.eq.s32.totalorder %s179, 0
      %s182 = sadd.s32 %s181, 1
      %s183 = scalar_select %p180, %s181, %s182
      %p186 = pneg %p180
      %p187 = scmp.eq.s32.totalorder %s29, 3
      %p188 = por %p186, %p187
      %p189 = scmp.ne.s32.totalorder %s181, %s184
      %p190 = scmp.eq.s32.totalorder %s29, 0
      %p191 = por %p189, %p190
      %p192 = scmp.ne.s32.totalorder %s181, %s184
      %p193 = scmp.eq.s32.totalorder %s34, 3
      %p194 = por %p192, %p193
      %p195 = scmp.ne.s32.totalorder %s184, %s185
      %p196 = scmp.eq.s32.totalorder %s34, 0
      %p197 = por %p195, %p196
      %p198 = scmp.ne.s32.totalorder %s184, %s185
      %p199 = scmp.eq.s32.totalorder %s35, 3
      %p200 = por %p198, %p199
      %p202 = scmp.ne.s32.totalorder %s185, %s201
      %p203 = scmp.eq.s32.totalorder %s35, 0
      %p204 = por %p202, %p203
      %s205 = ssub.s32 %s37, %s44
      %p206 = scmp.eq.s32.totalorder %s205, 0
      %s208 = sadd.s32 %s207, 1
      %s209 = scalar_select %p206, %s207, %s208
      %p212 = pneg %p206
      %p213 = scmp.eq.s32.totalorder %s29, 3
      %p214 = por %p212, %p213
      %p215 = scmp.ne.s32.totalorder %s207, %s210
      %p216 = scmp.eq.s32.totalorder %s29, 0
      %p217 = por %p215, %p216
      %p218 = scmp.ne.s32.totalorder %s207, %s210
      %p219 = scmp.eq.s32.totalorder %s34, 3
      %p220 = por %p218, %p219
      %p221 = scmp.ne.s32.totalorder %s210, %s211
      %p222 = scmp.eq.s32.totalorder %s34, 0
      %p223 = por %p221, %p222
      %p224 = scmp.ne.s32.totalorder %s210, %s211
      %p225 = scmp.eq.s32.totalorder %s35, 3
      %p226 = por %p224, %p225
      %p228 = scmp.ne.s32.totalorder %s211, %s227
      %p229 = scmp.eq.s32.totalorder %s35, 0
      %p230 = por %p228, %p229
      %s231 = ssub.s32 %s37, %s44
      %s232 = ssub.s32 %s36, %s48
      %s233 = sor.u32 %s231, %s232
      %p234 = scmp.eq.s32.totalorder %s233, 0
      %s236 = sadd.s32 %s235, 1
      %s237 = scalar_select %p234, %s235, %s236
      %p240 = pneg %p234
      %p241 = scmp.eq.s32.totalorder %s29, 3
      %p242 = por %p240, %p241
      %p243 = scmp.ne.s32.totalorder %s235, %s238
      %p244 = scmp.eq.s32.totalorder %s29, 0
      %p245 = por %p243, %p244
      %p246 = scmp.ne.s32.totalorder %s235, %s238
      %p247 = scmp.eq.s32.totalorder %s34, 3
      %p248 = por %p246, %p247
      %p249 = scmp.ne.s32.totalorder %s238, %s239
      %p250 = scmp.eq.s32.totalorder %s34, 0
      %p251 = por %p249, %p250
      %p252 = scmp.ne.s32.totalorder %s238, %s239
      %p253 = scmp.eq.s32.totalorder %s35, 3
      %p254 = por %p252, %p253
      %p256 = scmp.ne.s32.totalorder %s239, %s255
      %p257 = scmp.eq.s32.totalorder %s35, 0
      %p258 = por %p256, %p257
      %s259 = ssub.s32 %s37, %s44
      %s260 = ssub.s32 %s36, %s48
      %s261 = sor.u32 %s259, %s260
      %p262 = scmp.eq.s32.totalorder %s261, 0
      %s264 = sadd.s32 %s263, 1
      %s265 = scalar_select %p262, %s263, %s264
      %p268 = pneg %p262
      %p269 = scmp.eq.s32.totalorder %s29, 3
      %p270 = por %p268, %p269
      %p271 = scmp.ne.s32.totalorder %s263, %s266
      %p272 = scmp.eq.s32.totalorder %s29, 0
      %p273 = por %p271, %p272
      %p274 = scmp.ne.s32.totalorder %s263, %s266
      %p275 = scmp.eq.s32.totalorder %s34, 3
      %p276 = por %p274, %p275
      %p277 = scmp.ne.s32.totalorder %s266, %s267
      %p278 = scmp.eq.s32.totalorder %s34, 0
      %p279 = por %p277, %p278
      %p280 = scmp.ne.s32.totalorder %s266, %s267
      %p281 = scmp.eq.s32.totalorder %s35, 3
      %p282 = por %p280, %p281
      %p284 = scmp.ne.s32.totalorder %s267, %s283
      %p285 = scmp.eq.s32.totalorder %s35, 0
      %p286 = por %p284, %p285
      %s287 = ssub.s32 %s37, %s44
      %s288 = ssub.s32 %s36, %s48
      %s289 = sor.u32 %s287, %s288
      %p290 = scmp.eq.s32.totalorder %s289, 0
      %s292 = sadd.s32 %s291, 1
      %s293 = scalar_select %p290, %s291, %s292
      %p296 = pneg %p290
      %p297 = scmp.eq.s32.totalorder %s29, 3
      %p298 = por %p296, %p297
      %p299 = scmp.ne.s32.totalorder %s291, %s294
      %p300 = scmp.eq.s32.totalorder %s29, 0
      %p301 = por %p299, %p300
      %p302 = scmp.ne.s32.totalorder %s291, %s294
      %p303 = scmp.eq.s32.totalorder %s34, 3
      %p304 = por %p302, %p303
      %p305 = scmp.ne.s32.totalorder %s294, %s295
      %p306 = scmp.eq.s32.totalorder %s34, 0
      %p307 = por %p305, %p306
      %p308 = scmp.ne.s32.totalorder %s294, %s295
      %p309 = scmp.eq.s32.totalorder %s35, 3
      %p310 = por %p308, %p309
      %p312 = scmp.ne.s32.totalorder %s295, %s311
      %p313 = scmp.eq.s32.totalorder %s35, 0
      %p314 = por %p312, %p313
      %p315 = scmp.le.s32.totalorder 1, %s29
      %p316 = scmp.lt.s32.totalorder %s29, 5
      %p317 = pnand %p315, %p316
      %p318 = pneg %p317
      // Predicated region
      $region9: #{tpu_custom_call.1} parent=5 // pred_check
        _
      $region10: #{tpu_custom_call.1} parent=5 // pred_check_branch
        %320 = sbr.rel (%p317) target = $region12
      $region11: #{tpu_custom_call.1} parent=5 // pred_region
        %s321 = ssub.s32 %s29, 1
        // Predicated region
        $region13: #{tpu_custom_call.1} parent=11 // pred_check
          %p322 = pneg %p67
        $region14: #{tpu_custom_call.1} parent=11 // pred_check_branch
          %324 = sbr.rel (%p322) target = $region16
        $region15: #{tpu_custom_call.1} parent=11 // pred_region
          %s325 = smul.u32 16, %s38
          %s327 = ssub.s32 1024, 1024
          %328 = vsyncadd [#allocation3], %s327
          %s329 = smul.addr %s325, 64
          %s330 = scalar_lea.hbm %s0, %s329
          %s331 = sshll.u32 [#allocation2], 4
          %s332 = int_to_ptr.vmem [resolvable:$true] %s331
          %337 = dma.hbm_to_vmem [thread:$0]  %s330, 1024, %s332, [#allocation3], 64, 64, 4
        $region16: #{tpu_custom_call.1} parent=11 // pred_fallthru
          _
      $region12: #{tpu_custom_call.1} parent=5 // pred_fallthru
        _
      %p338 = scmp.lt.s32.totalorder %s29, 4
      // Predicated region
      $region17: #{tpu_custom_call.1} parent=5 // pred_check
        %p339 = pneg %p338
      $region18: #{tpu_custom_call.1} parent=5 // pred_check_branch
        %341 = sbr.rel (%p339) target = $region20
      $region19: #{tpu_custom_call.1} parent=5 // pred_region
        // Predicated region
        $region21: #{tpu_custom_call.1} parent=19 // pred_check
          %p342 = pneg %p87
        $region22: #{tpu_custom_call.1} parent=19 // pred_check_branch
          %344 = sbr.rel (%p342) target = $region24
        $region23: #{tpu_custom_call.1} parent=19 // pred_region
          %s345 = sand.u32 %s29, 1
          %s346 = scalar_lea.sflag [#allocation6], %s345
          %s347 = sand.u32 %s77, 1
          %s348 = smul.addr %s347, 64
          %s349 = scalar_lea.vmem [#allocation5], %s348
          %s351 = ssub.s32 1024, 1024
          %352 = vsyncadd %s346, %s351
          %s353 = smul.addr %s37, 16
          %s354 = smul.addr %s353, 64
          %s355 = scalar_lea.hbm %s1, %s354
          %s356 = sshll.u32 %s349, 4
          %s357 = int_to_ptr.vmem [resolvable:$true] %s356
          %362 = dma.hbm_to_vmem [thread:$0]  %s355, 1024, %s357, %s346, 64, 64, 4
        $region24: #{tpu_custom_call.1} parent=19 // pred_fallthru
          _
        // Predicated region
        $region25: #{tpu_custom_call.1} parent=19 // pred_check
          %p363 = pneg %p113
        $region26: #{tpu_custom_call.1} parent=19 // pred_check_branch
          %365 = sbr.rel (%p363) target = $region28
        $region27: #{tpu_custom_call.1} parent=19 // pred_region
          %p366 = scmp.lt.s32.totalorder %s37, 3
          %s367 = scalar_select %p366, %s37, 3
          %s368 = scalar_lea.vmem %s2, %s367
        $region28: #{tpu_custom_call.1} parent=19 // pred_fallthru
          _
        // Predicated region
        $region29: #{tpu_custom_call.1} parent=19 // pred_check
          %p369 = pneg %p139
        $region30: #{tpu_custom_call.1} parent=19 // pred_check_branch
          %371 = sbr.rel (%p369) target = $region32
        $region31: #{tpu_custom_call.1} parent=19 // pred_region
          %s372 = sand.u32 %s29, 1
          %s373 = scalar_lea.sflag [#allocation6], %s372
          %s374 = sand.u32 %s129, 1
          %s375 = smul.addr %s374, 64
          %s376 = scalar_lea.vmem [#allocation7], %s375
          %s378 = ssub.s32 1024, 1024
          %379 = vsyncadd %s373, %s378
          %s380 = smul.addr %s37, 16
          %s381 = smul.addr %s380, 64
          %s382 = scalar_lea.hbm %s3, %s381
          %s383 = sshll.u32 %s376, 4
          %s384 = int_to_ptr.vmem [resolvable:$true] %s383
          %389 = dma.hbm_to_vmem [thread:$0]  %s382, 1024, %s384, %s373, 64, 64, 4
        $region32: #{tpu_custom_call.1} parent=19 // pred_fallthru
          _
        // Predicated region
        $region33: #{tpu_custom_call.1} parent=19 // pred_check
          %p390 = pneg %p165
        $region34: #{tpu_custom_call.1} parent=19 // pred_check_branch
          %392 = sbr.rel (%p390) target = $region36
        $region35: #{tpu_custom_call.1} parent=19 // pred_region
          %p393 = scmp.lt.s32.totalorder %s37, 3
          %s394 = scalar_select %p393, %s37, 3
          %s395 = scalar_lea.vmem %s4, %s394
        $region36: #{tpu_custom_call.1} parent=19 // pred_fallthru
          _
        // Predicated region
        $region37: #{tpu_custom_call.1} parent=19 // pred_check
          %p396 = pneg %p191
        $region38: #{tpu_custom_call.1} parent=19 // pred_check_branch
          %398 = sbr.rel (%p396) target = $region40
        $region39: #{tpu_custom_call.1} parent=19 // pred_region
          %s399 = sand.u32 %s181, 1
          %s400 = scalar_lea.sflag [#allocation9], %s399
          %s401 = sand.u32 %s181, 1
          %s402 = smul.addr %s401, 64
          %s403 = scalar_lea.vmem [#allocation8], %s402
          %s405 = ssub.s32 1024, 1024
          %406 = vsyncadd %s400, %s405
          %s407 = smul.addr %s37, 16
          %s408 = smul.addr %s407, 64
          %s409 = scalar_lea.hbm %s5, %s408
          %s410 = sshll.u32 %s403, 4
          %s411 = int_to_ptr.vmem [resolvable:$true] %s410
          %416 = dma.hbm_to_vmem [thread:$0]  %s409, 1024, %s411, %s400, 64, 64, 4
        $region40: #{tpu_custom_call.1} parent=19 // pred_fallthru
          _
        // Predicated region
        $region41: #{tpu_custom_call.1} parent=19 // pred_check
          %p417 = pneg %p217
        $region42: #{tpu_custom_call.1} parent=19 // pred_check_branch
          %419 = sbr.rel (%p417) target = $region44
        $region43: #{tpu_custom_call.1} parent=19 // pred_region
          %p420 = scmp.lt.s32.totalorder %s37, 3
          %s421 = scalar_select %p420, %s37, 3
          %s422 = scalar_lea.vmem %s6, %s421
        $region44: #{tpu_custom_call.1} parent=19 // pred_fallthru
          _
      $region20: #{tpu_custom_call.1} parent=5 // pred_fallthru
        _
      %p423 = scmp.le.s32.totalorder 1, %s29
      %p424 = scmp.lt.s32.totalorder %s29, 5
      %p425 = pnand %p423, %p424
      %p426 = pneg %p425
      // Predicated region
      $region45: #{tpu_custom_call.1} parent=5 // pred_check
        _
      $region46: #{tpu_custom_call.1} parent=5 // pred_check_branch
        %428 = sbr.rel (%p425) target = $region48
      $region47: #{tpu_custom_call.1} parent=5 // pred_region
        %s429 = ssub.s32 %s29, 1
        // Predicated region
        $region49: #{tpu_custom_call.1} parent=47 // pred_check
          %p430 = pneg %p67
        $region50: #{tpu_custom_call.1} parent=47 // pred_check_branch
          %432 = sbr.rel (%p430) target = $region52
        $region51: #{tpu_custom_call.1} parent=47 // pred_region
          %433 = dma.done [#allocation3], 1024
        $region52: #{tpu_custom_call.1} parent=47 // pred_fallthru
          _
        %s434 = sand.u32 %s34, 1
        %s435 = scalar_lea.sflag [#allocation6], %s434
        %s436 = sand.u32 %s80, 1
        %s437 = smul.addr %s436, 64
        %s438 = scalar_lea.vmem [#allocation5], %s437
        // Predicated region
        $region53: #{tpu_custom_call.1} parent=47 // pred_check
          %p439 = pneg %p93
        $region54: #{tpu_custom_call.1} parent=47 // pred_check_branch
          %441 = sbr.rel (%p439) target = $region56
        $region55: #{tpu_custom_call.1} parent=47 // pred_region
          %442 = dma.done %s435, 1024
        $region56: #{tpu_custom_call.1} parent=47 // pred_fallthru
          _
        %s443 = sand.u32 %s34, 1
        %s444 = scalar_lea.sflag [#allocation6], %s443
        %s445 = sand.u32 %s132, 1
        %s446 = smul.addr %s445, 64
        %s447 = scalar_lea.vmem [#allocation7], %s446
        // Predicated region
        $region57: #{tpu_custom_call.1} parent=47 // pred_check
          %p448 = pneg %p145
        $region58: #{tpu_custom_call.1} parent=47 // pred_check_branch
          %450 = sbr.rel (%p448) target = $region60
        $region59: #{tpu_custom_call.1} parent=47 // pred_region
          %451 = dma.done %s444, 1024
        $region60: #{tpu_custom_call.1} parent=47 // pred_fallthru
          _
        %s452 = sand.u32 %s184, 1
        %s453 = scalar_lea.sflag [#allocation9], %s452
        %s454 = sand.u32 %s184, 1
        %s455 = smul.addr %s454, 64
        %s456 = scalar_lea.vmem [#allocation8], %s455
        // Predicated region
        $region61: #{tpu_custom_call.1} parent=47 // pred_check
          %p457 = pneg %p197
        $region62: #{tpu_custom_call.1} parent=47 // pred_check_branch
          %459 = sbr.rel (%p457) target = $region64
        $region63: #{tpu_custom_call.1} parent=47 // pred_region
          %460 = dma.done %s453, 1024
        $region64: #{tpu_custom_call.1} parent=47 // pred_fallthru
          _
        %p461 = pneg %p67
        %p462 = pneg %p64
        %s463 = sand.u32 %s34, 1
        %s464 = scalar_lea.sflag [#allocation6], %s463
        %s465 = sand.u32 %s80, 1
        %s466 = smul.addr %s465, 64
        %s467 = scalar_lea.vmem [#allocation5], %s466
        %p468 = pneg %p93
        %p469 = pneg %p90
        %p470 = scmp.lt.s32.totalorder %s39, 3
        %s471 = scalar_select %p470, %s39, 3
        %s472 = scalar_lea.vmem %s2, %s471
        %p473 = pneg %p119
        %p474 = pneg %p116
        %s475 = sand.u32 %s34, 1
        %s476 = scalar_lea.sflag [#allocation6], %s475
        %s477 = sand.u32 %s132, 1
        %s478 = smul.addr %s477, 64
        %s479 = scalar_lea.vmem [#allocation7], %s478
        %p480 = pneg %p145
        %p481 = pneg %p142
        %p482 = scmp.lt.s32.totalorder %s39, 3
        %s483 = scalar_select %p482, %s39, 3
        %s484 = scalar_lea.vmem %s4, %s483
        %p485 = pneg %p171
        %p486 = pneg %p168
        %s487 = sand.u32 %s184, 1
        %s488 = scalar_lea.sflag [#allocation9], %s487
        %s489 = sand.u32 %s184, 1
        %s490 = smul.addr %s489, 64
        %s491 = scalar_lea.vmem [#allocation8], %s490
        %p492 = pneg %p197
        %p493 = pneg %p194
        %p494 = scmp.lt.s32.totalorder %s39, 3
        %s495 = scalar_select %p494, %s39, 3
        %s496 = scalar_lea.vmem %s6, %s495
        %p497 = pneg %p223
        %p498 = pneg %p220
        %p499 = pneg %p251
        %p500 = pneg %p248
        %s501 = sand.u32 %s238, 1
        %s502 = scalar_lea.sflag [#allocation4], %s501
        %s503 = sand.u32 %s238, 1
        %s504 = smul.addr %s503, 64
        %s505 = scalar_lea.vmem [#allocation10], %s504
        %p506 = pneg %p279
        %p507 = pneg %p276
        %s508 = sand.u32 %s34, 1
        %s509 = scalar_lea.sflag [#allocation12], %s508
        %s510 = sand.u32 %s266, 1
        %s511 = smul.addr %s510, 64
        %s512 = scalar_lea.vmem [#allocation11], %s511
        %p513 = pneg %p307
        %p514 = pneg %p304
        %s515 = sand.u32 %s34, 1
        %s516 = scalar_lea.sflag [#allocation12], %s515
        %s517 = sand.u32 %s294, 1
        %s518 = smul.addr %s517, 64
        %s519 = scalar_lea.vmem [#allocation13], %s518
        %s520 = smul.u32 16, %s38
        %p521 = scmp.lt.s32.totalorder %s39, 3
        %s522 = scalar_select %p521, %s39, 3
        %s523 = scalar_lea.vmem %s2, %s522
        %p524 = scmp.lt.s32.totalorder %s39, 3
        %s525 = scalar_select %p524, %s39, 3
        %s526 = scalar_lea.vmem %s4, %s525
        %p527 = scmp.lt.s32.totalorder %s39, 3
        %s528 = scalar_select %p527, %s39, 3
        %s529 = scalar_lea.vmem %s6, %s528
        %s530 = smul.u32 16, %s38
        %s531 = smul.u32 16, %s38
        %s532 = smul.u32 16, %s38
        %v534 = vld [vmem:[#allocation2] sm:$0xf]
        %v535 = vld [vmem:[#allocation2 + $0x4] sm:$0xf]
        %v536 = vld [vmem:[#allocation2 + $0x8] sm:$0xf]
        %v537 = vld [vmem:[#allocation2 + $0xc] sm:$0xf]
        %v538 = vld [vmem:[#allocation2 + $0x10] sm:$0xf]
        %v539 = vld [vmem:[#allocation2 + $0x14] sm:$0xf]
        %v540 = vld [vmem:[#allocation2 + $0x18] sm:$0xf]
        %v541 = vld [vmem:[#allocation2 + $0x1c] sm:$0xf]
        %v542 = vld [vmem:[#allocation2 + $0x20] sm:$0xf]
        %v543 = vld [vmem:[#allocation2 + $0x24] sm:$0xf]
        %v544 = vld [vmem:[#allocation2 + $0x28] sm:$0xf]
        %v545 = vld [vmem:[#allocation2 + $0x2c] sm:$0xf]
        %v546 = vld [vmem:[#allocation2 + $0x30] sm:$0xf]
        %v547 = vld [vmem:[#allocation2 + $0x34] sm:$0xf]
        %v548 = vld [vmem:[#allocation2 + $0x38] sm:$0xf]
        %v549 = vld [vmem:[#allocation2 + $0x3c] sm:$0xf]
        %v550 = vld [vmem:[%s438] sm:$0xf]
        %v551 = vld [vmem:[%s438 + $0x4] sm:$0xf]
        %v552 = vld [vmem:[%s438 + $0x8] sm:$0xf]
        %v553 = vld [vmem:[%s438 + $0xc] sm:$0xf]
        %v554 = vld [vmem:[%s438 + $0x10] sm:$0xf]
        %v555 = vld [vmem:[%s438 + $0x14] sm:$0xf]
        %v556 = vld [vmem:[%s438 + $0x18] sm:$0xf]
        %v557 = vld [vmem:[%s438 + $0x1c] sm:$0xf]
        %v558 = vld [vmem:[%s438 + $0x20] sm:$0xf]
        %v559 = vld [vmem:[%s438 + $0x24] sm:$0xf]
        %v560 = vld [vmem:[%s438 + $0x28] sm:$0xf]
        %v561 = vld [vmem:[%s438 + $0x2c] sm:$0xf]
        %v562 = vld [vmem:[%s438 + $0x30] sm:$0xf]
        %v563 = vld [vmem:[%s438 + $0x34] sm:$0xf]
        %v564 = vld [vmem:[%s438 + $0x38] sm:$0xf]
        %v565 = vld [vmem:[%s438 + $0x3c] sm:$0xf]
        %v566 = vld [vmem:[%s523] sm:$0x1]
        %v568 = vlaneseq
        %v569 = vshrl.u32 %v568, 7
        %v570 = vsub.s32 0, %v569
        %v571 = vrot.slane %v566, %v570
        %v589 = vunpack.c.l.b16 %v534
        %v590 = vunpack.c.l.b16 %v535
        %v591 = vunpack.c.l.b16 %v536
        %v592 = vunpack.c.l.b16 %v537
        %v593 = vunpack.c.l.b16 %v538
        %v594 = vunpack.c.l.b16 %v539
        %v595 = vunpack.c.l.b16 %v540
        %v596 = vunpack.c.l.b16 %v541
        %v597 = vunpack.c.l.b16 %v542
        %v598 = vunpack.c.l.b16 %v543
        %v599 = vunpack.c.l.b16 %v544
        %v600 = vunpack.c.l.b16 %v545
        %v601 = vunpack.c.l.b16 %v546
        %v602 = vunpack.c.l.b16 %v547
        %v603 = vunpack.c.l.b16 %v548
        %v604 = vunpack.c.l.b16 %v549
        %v605 = vpack.c.b16 %v590, %v589
        %v606 = vpack.c.b16 %v592, %v591
        %v607 = vpack.c.b16 %v594, %v593
        %v608 = vpack.c.b16 %v596, %v595
        %v609 = vpack.c.b16 %v598, %v597
        %v610 = vpack.c.b16 %v600, %v599
        %v611 = vpack.c.b16 %v602, %v601
        %v612 = vpack.c.b16 %v604, %v603
        %v637 = vunpack.c.l.b16 %v550
        %v638 = vunpack.c.l.b16 %v551
        %v639 = vunpack.c.l.b16 %v552
        %v640 = vunpack.c.l.b16 %v553
        %v641 = vunpack.c.l.b16 %v554
        %v642 = vunpack.c.l.b16 %v555
        %v643 = vunpack.c.l.b16 %v556
        %v644 = vunpack.c.l.b16 %v557
        %v645 = vunpack.c.l.b16 %v558
        %v646 = vunpack.c.l.b16 %v559
        %v647 = vunpack.c.l.b16 %v560
        %v648 = vunpack.c.l.b16 %v561
        %v649 = vunpack.c.l.b16 %v562
        %v650 = vunpack.c.l.b16 %v563
        %v651 = vunpack.c.l.b16 %v564
        %v652 = vunpack.c.l.b16 %v565
        %v653 = vpack.c.b16 %v638, %v637
        %v654 = vpack.c.b16 %v640, %v639
        %v655 = vpack.c.b16 %v642, %v641
        %v656 = vpack.c.b16 %v644, %v643
        %v657 = vpack.c.b16 %v646, %v645
        %v658 = vpack.c.b16 %v648, %v647
        %v659 = vpack.c.b16 %v650, %v649
        %v660 = vpack.c.b16 %v652, %v651
        %669 = vmatprep.subr.bf16.mxu0 0
        %670 = vmatpush1.bf16.msra.mxu0 %v653
        %671 = vmatprep.subr.bf16.mxu0 0
        %672 = vmatpush1.bf16.msra.mxu0 %v654
        %673 = vmatprep.subr.bf16.mxu0 0
        %674 = vmatpush1.bf16.msra.mxu0 %v655
        %675 = vmatprep.subr.bf16.mxu0 0
        %676 = vmatpush1.bf16.msra.mxu0 %v656
        %677 = vmatprep.subr.bf16.mxu0 0
        %678 = vmatpush1.bf16.msra.mxu0 %v657
        %679 = vmatprep.subr.bf16.mxu0 0
        %680 = vmatpush1.bf16.msra.mxu0 %v658
        %681 = vmatprep.subr.bf16.mxu0 0
        %682 = vmatpush1.bf16.msra.mxu0 %v659
        %683 = vmatprep.subr.bf16.mxu0 0
        %684 = vmatpush1.bf16.msra.mxu0 %v660
        %685 = vmatprep.subr.bf16.mxu0 0
        %686 = vmatpush1.bf16.msra.mxu0 0
        %687 = vmatprep.subr.bf16.mxu0 0
        %688 = vmatpush1.bf16.msra.mxu0 0
        %689 = vmatprep.subr.bf16.mxu0 0
        %690 = vmatpush1.bf16.msra.mxu0 0
        %691 = vmatprep.subr.bf16.mxu0 0
        %692 = vmatpush1.bf16.msra.mxu0 0
        %693 = vmatprep.subr.bf16.mxu0 0
        %694 = vmatpush1.bf16.msra.mxu0 0
        %695 = vmatprep.subr.bf16.mxu0 0
        %696 = vmatpush1.bf16.msra.mxu0 0
        %697 = vmatprep.subr.bf16.mxu0 0
        %698 = vmatpush1.bf16.msra.mxu0 0
        %699 = vmatprep.subr.bf16.mxu0 0
        %700 = vmatpush1.bf16.msra.mxu0 0
        %701 = vmatprep.mubr.bf16.mxu0 0
        %702 = vmatmul.mubr.bf16.gmra.mrb[0].mxu0 %v605
        %v703 = vpop.f32.mrb[0].mxu0
        %v704 = vadd.f32 %v571, %v703
        %v705 = vpop.f32.mrb[0].mxu0
        %v706 = vpop.f32.mrb[0].mxu0
        %v707 = vadd.f32 %v571, %v706
        %v708 = vpop.f32.mrb[0].mxu0
        %709 = vmatprep.mubr.bf16.mxu0 0
        %710 = vmatmul.mubr.bf16.gmra.mrb[0].mxu0 %v606
        %v711 = vpop.f32.mrb[0].mxu0
        %v712 = vadd.f32 %v571, %v711
        %v713 = vpop.f32.mrb[0].mxu0
        %v714 = vpop.f32.mrb[0].mxu0
        %v715 = vadd.f32 %v571, %v714
        %v716 = vpop.f32.mrb[0].mxu0
        %717 = vmatprep.mubr.bf16.mxu0 0
        %718 = vmatmul.mubr.bf16.gmra.mrb[0].mxu0 %v607
        %v719 = vpop.f32.mrb[0].mxu0
        %v720 = vadd.f32 %v571, %v719
        %v721 = vpop.f32.mrb[0].mxu0
        %v722 = vpop.f32.mrb[0].mxu0
        %v723 = vadd.f32 %v571, %v722
        %v724 = vpop.f32.mrb[0].mxu0
        %725 = vmatprep.mubr.bf16.mxu0 0
        %726 = vmatmul.mubr.bf16.gmra.mrb[0].mxu0 %v608
        %v727 = vpop.f32.mrb[0].mxu0
        %v728 = vadd.f32 %v571, %v727
        %v729 = vpop.f32.mrb[0].mxu0
        %v730 = vpop.f32.mrb[0].mxu0
        %v731 = vadd.f32 %v571, %v730
        %v732 = vpop.f32.mrb[0].mxu0
        %733 = vmatprep.mubr.bf16.mxu0 0
        %734 = vmatmul.mubr.bf16.gmra.mrb[0].mxu0 %v609
        %v735 = vpop.f32.mrb[0].mxu0
        %v736 = vadd.f32 %v571, %v735
        %v737 = vpop.f32.mrb[0].mxu0
        %v738 = vpop.f32.mrb[0].mxu0
        %v739 = vadd.f32 %v571, %v738
        %v740 = vpop.f32.mrb[0].mxu0
        %741 = vmatprep.mubr.bf16.mxu0 0
        %742 = vmatmul.mubr.bf16.gmra.mrb[0].mxu0 %v610
        %v743 = vpop.f32.mrb[0].mxu0
        %v744 = vadd.f32 %v571, %v743
        %v745 = vpop.f32.mrb[0].mxu0
        %v746 = vpop.f32.mrb[0].mxu0
        %v747 = vadd.f32 %v571, %v746
        %v748 = vpop.f32.mrb[0].mxu0
        %749 = vmatprep.mubr.bf16.mxu0 0
        %750 = vmatmul.mubr.bf16.gmra.mrb[0].mxu0 %v611
        %v751 = vpop.f32.mrb[0].mxu0
        %v752 = vadd.f32 %v571, %v751
        %v753 = vpop.f32.mrb[0].mxu0
        %v754 = vpop.f32.mrb[0].mxu0
        %v755 = vadd.f32 %v571, %v754
        %v756 = vpop.f32.mrb[0].mxu0
        %757 = vmatprep.mubr.bf16.mxu0 0
        %758 = vmatmul.mubr.bf16.gmra.mrb[0].mxu0 %v612
        %v759 = vpop.f32.mrb[0].mxu0
        %v760 = vadd.f32 %v571, %v759
        %v761 = vpop.f32.mrb[0].mxu0
        %v762 = vpop.f32.mrb[0].mxu0
        %v763 = vadd.f32 %v571, %v762
        %v764 = vpop.f32.mrb[0].mxu0
        %765 = vdwg.mxu0
        %v766 = vld [vmem:[%s447] sm:$0xf]
        %v767 = vld [vmem:[%s447 + $0x4] sm:$0xf]
        %v768 = vld [vmem:[%s447 + $0x8] sm:$0xf]
        %v769 = vld [vmem:[%s447 + $0xc] sm:$0xf]
        %v770 = vld [vmem:[%s447 + $0x10] sm:$0xf]
        %v771 = vld [vmem:[%s447 + $0x14] sm:$0xf]
        %v772 = vld [vmem:[%s447 + $0x18] sm:$0xf]
        %v773 = vld [vmem:[%s447 + $0x1c] sm:$0xf]
        %v774 = vld [vmem:[%s447 + $0x20] sm:$0xf]
        %v775 = vld [vmem:[%s447 + $0x24] sm:$0xf]
        %v776 = vld [vmem:[%s447 + $0x28] sm:$0xf]
        %v777 = vld [vmem:[%s447 + $0x2c] sm:$0xf]
        %v778 = vld [vmem:[%s447 + $0x30] sm:$0xf]
        %v779 = vld [vmem:[%s447 + $0x34] sm:$0xf]
        %v780 = vld [vmem:[%s447 + $0x38] sm:$0xf]
        %v781 = vld [vmem:[%s447 + $0x3c] sm:$0xf]
        %v782 = vld [vmem:[%s526] sm:$0x1]
        %v784 = vlaneseq
        %v785 = vshrl.u32 %v784, 7
        %v786 = vsub.s32 0, %v785
        %v787 = vrot.slane %v782, %v786
        %v805 = vunpack.c.l.b16 %v766
        %v806 = vunpack.c.l.b16 %v767
        %v807 = vunpack.c.l.b16 %v768
        %v808 = vunpack.c.l.b16 %v769
        %v809 = vunpack.c.l.b16 %v770
        %v810 = vunpack.c.l.b16 %v771
        %v811 = vunpack.c.l.b16 %v772
        %v812 = vunpack.c.l.b16 %v773
        %v813 = vunpack.c.l.b16 %v774
        %v814 = vunpack.c.l.b16 %v775
        %v815 = vunpack.c.l.b16 %v776
        %v816 = vunpack.c.l.b16 %v777
        %v817 = vunpack.c.l.b16 %v778
        %v818 = vunpack.c.l.b16 %v779
        %v819 = vunpack.c.l.b16 %v780
        %v820 = vunpack.c.l.b16 %v781
        %v821 = vpack.c.b16 %v806, %v805
        %v822 = vpack.c.b16 %v808, %v807
        %v823 = vpack.c.b16 %v810, %v809
        %v824 = vpack.c.b16 %v812, %v811
        %v825 = vpack.c.b16 %v814, %v813
        %v826 = vpack.c.b16 %v816, %v815
        %v827 = vpack.c.b16 %v818, %v817
        %v828 = vpack.c.b16 %v820, %v819
        %837 = vmatprep.subr.bf16.mxu0 0
        %838 = vmatpush1.bf16.msra.mxu0 %v821
        %839 = vmatprep.subr.bf16.mxu0 0
        %840 = vmatpush1.bf16.msra.mxu0 %v822
        %841 = vmatprep.subr.bf16.mxu0 0
        %842 = vmatpush1.bf16.msra.mxu0 %v823
        %843 = vmatprep.subr.bf16.mxu0 0
        %844 = vmatpush1.bf16.msra.mxu0 %v824
        %845 = vmatprep.subr.bf16.mxu0 0
        %846 = vmatpush1.bf16.msra.mxu0 %v825
        %847 = vmatprep.subr.bf16.mxu0 0
        %848 = vmatpush1.bf16.msra.mxu0 %v826
        %849 = vmatprep.subr.bf16.mxu0 0
        %850 = vmatpush1.bf16.msra.mxu0 %v827
        %851 = vmatprep.subr.bf16.mxu0 0
        %852 = vmatpush1.bf16.msra.mxu0 %v828
        %853 = vmatprep.subr.bf16.mxu0 0
        %854 = vmatpush1.bf16.msra.mxu0 0
        %855 = vmatprep.subr.bf16.mxu0 0
        %856 = vmatpush1.bf16.msra.mxu0 0
        %857 = vmatprep.subr.bf16.mxu0 0
        %858 = vmatpush1.bf16.msra.mxu0 0
        %859 = vmatprep.subr.bf16.mxu0 0
        %860 = vmatpush1.bf16.msra.mxu0 0
        %861 = vmatprep.subr.bf16.mxu0 0
        %862 = vmatpush1.bf16.msra.mxu0 0
        %863 = vmatprep.subr.bf16.mxu0 0
        %864 = vmatpush1.bf16.msra.mxu0 0
        %865 = vmatprep.subr.bf16.mxu0 0
        %866 = vmatpush1.bf16.msra.mxu0 0
        %867 = vmatprep.subr.bf16.mxu0 0
        %868 = vmatpush1.bf16.msra.mxu0 0
        %869 = vmatprep.mubr.bf16.mxu0 0
        %870 = vmatmul.mubr.bf16.gmra.mrb[0].mxu0 %v605
        %v871 = vpop.f32.mrb[0].mxu0
        %v872 = vadd.f32 %v787, %v871
        %v873 = vpop.f32.mrb[0].mxu0
        %v874 = vpop.f32.mrb[0].mxu0
        %v875 = vadd.f32 %v787, %v874
        %v876 = vpop.f32.mrb[0].mxu0
        %877 = vmatprep.mubr.bf16.mxu0 0
        %878 = vmatmul.mubr.bf16.gmra.mrb[0].mxu0 %v606
        %v879 = vpop.f32.mrb[0].mxu0
        %v880 = vadd.f32 %v787, %v879
        %v881 = vpop.f32.mrb[0].mxu0
        %v882 = vpop.f32.mrb[0].mxu0
        %v883 = vadd.f32 %v787, %v882
        %v884 = vpop.f32.mrb[0].mxu0
        %885 = vmatprep.mubr.bf16.mxu0 0
        %886 = vmatmul.mubr.bf16.gmra.mrb[0].mxu0 %v607
        %v887 = vpop.f32.mrb[0].mxu0
        %v888 = vadd.f32 %v787, %v887
        %v889 = vpop.f32.mrb[0].mxu0
        %v890 = vpop.f32.mrb[0].mxu0
        %v891 = vadd.f32 %v787, %v890
        %v892 = vpop.f32.mrb[0].mxu0
        %893 = vmatprep.mubr.bf16.mxu0 0
        %894 = vmatmul.mubr.bf16.gmra.mrb[0].mxu0 %v608
        %v895 = vpop.f32.mrb[0].mxu0
        %v896 = vadd.f32 %v787, %v895
        %v897 = vpop.f32.mrb[0].mxu0
        %v898 = vpop.f32.mrb[0].mxu0
        %v899 = vadd.f32 %v787, %v898
        %v900 = vpop.f32.mrb[0].mxu0
        %901 = vmatprep.mubr.bf16.mxu0 0
        %902 = vmatmul.mubr.bf16.gmra.mrb[0].mxu0 %v609
        %v903 = vpop.f32.mrb[0].mxu0
        %v904 = vadd.f32 %v787, %v903
        %v905 = vpop.f32.mrb[0].mxu0
        %v906 = vpop.f32.mrb[0].mxu0
        %v907 = vadd.f32 %v787, %v906
        %v908 = vpop.f32.mrb[0].mxu0
        %909 = vmatprep.mubr.bf16.mxu0 0
        %910 = vmatmul.mubr.bf16.gmra.mrb[0].mxu0 %v610
        %v911 = vpop.f32.mrb[0].mxu0
        %v912 = vadd.f32 %v787, %v911
        %v913 = vpop.f32.mrb[0].mxu0
        %v914 = vpop.f32.mrb[0].mxu0
        %v915 = vadd.f32 %v787, %v914
        %v916 = vpop.f32.mrb[0].mxu0
        %917 = vmatprep.mubr.bf16.mxu0 0
        %918 = vmatmul.mubr.bf16.gmra.mrb[0].mxu0 %v611
        %v919 = vpop.f32.mrb[0].mxu0
        %v920 = vadd.f32 %v787, %v919
        %v921 = vpop.f32.mrb[0].mxu0
        %v922 = vpop.f32.mrb[0].mxu0
        %v923 = vadd.f32 %v787, %v922
        %v924 = vpop.f32.mrb[0].mxu0
        %925 = vmatprep.mubr.bf16.mxu0 0
        %926 = vmatmul.mubr.bf16.gmra.mrb[0].mxu0 %v612
        %v927 = vpop.f32.mrb[0].mxu0
        %v928 = vadd.f32 %v787, %v927
        %v929 = vpop.f32.mrb[0].mxu0
        %v930 = vpop.f32.mrb[0].mxu0
        %v931 = vadd.f32 %v787, %v930
        %v932 = vpop.f32.mrb[0].mxu0
        %933 = vdwg.mxu0
        %v934 = vld [vmem:[%s456] sm:$0xf]
        %v935 = vld [vmem:[%s456 + $0x4] sm:$0xf]
        %v936 = vld [vmem:[%s456 + $0x8] sm:$0xf]
        %v937 = vld [vmem:[%s456 + $0xc] sm:$0xf]
        %v938 = vld [vmem:[%s456 + $0x10] sm:$0xf]
        %v939 = vld [vmem:[%s456 + $0x14] sm:$0xf]
        %v940 = vld [vmem:[%s456 + $0x18] sm:$0xf]
        %v941 = vld [vmem:[%s456 + $0x1c] sm:$0xf]
        %v942 = vld [vmem:[%s456 + $0x20] sm:$0xf]
        %v943 = vld [vmem:[%s456 + $0x24] sm:$0xf]
        %v944 = vld [vmem:[%s456 + $0x28] sm:$0xf]
        %v945 = vld [vmem:[%s456 + $0x2c] sm:$0xf]
        %v946 = vld [vmem:[%s456 + $0x30] sm:$0xf]
        %v947 = vld [vmem:[%s456 + $0x34] sm:$0xf]
        %v948 = vld [vmem:[%s456 + $0x38] sm:$0xf]
        %v949 = vld [vmem:[%s456 + $0x3c] sm:$0xf]
        %v950 = vld [vmem:[%s529] sm:$0x1]
        %v952 = vlaneseq
        %v953 = vshrl.u32 %v952, 7
        %v954 = vsub.s32 0, %v953
        %v955 = vrot.slane %v950, %v954
        %v973 = vunpack.c.l.b16 %v934
        %v974 = vunpack.c.l.b16 %v935
        %v975 = vunpack.c.l.b16 %v936
        %v976 = vunpack.c.l.b16 %v937
        %v977 = vunpack.c.l.b16 %v938
        %v978 = vunpack.c.l.b16 %v939
        %v979 = vunpack.c.l.b16 %v940
        %v980 = vunpack.c.l.b16 %v941
        %v981 = vunpack.c.l.b16 %v942
        %v982 = vunpack.c.l.b16 %v943
        %v983 = vunpack.c.l.b16 %v944
        %v984 = vunpack.c.l.b16 %v945
        %v985 = vunpack.c.l.b16 %v946
        %v986 = vunpack.c.l.b16 %v947
        %v987 = vunpack.c.l.b16 %v948
        %v988 = vunpack.c.l.b16 %v949
        %v989 = vpack.c.b16 %v974, %v973
        %v990 = vpack.c.b16 %v976, %v975
        %v991 = vpack.c.b16 %v978, %v977
        %v992 = vpack.c.b16 %v980, %v979
        %v993 = vpack.c.b16 %v982, %v981
        %v994 = vpack.c.b16 %v984, %v983
        %v995 = vpack.c.b16 %v986, %v985
        %v996 = vpack.c.b16 %v988, %v987
        %1005 = vmatprep.subr.bf16.mxu0 0
        %1006 = vmatpush1.bf16.msra.mxu0 %v989
        %1007 = vmatprep.subr.bf16.mxu0 0
        %1008 = vmatpush1.bf16.msra.mxu0 %v990
        %1009 = vmatprep.subr.bf16.mxu0 0
        %1010 = vmatpush1.bf16.msra.mxu0 %v991
        %1011 = vmatprep.subr.bf16.mxu0 0
        %1012 = vmatpush1.bf16.msra.mxu0 %v992
        %1013 = vmatprep.subr.bf16.mxu0 0
        %1014 = vmatpush1.bf16.msra.mxu0 %v993
        %1015 = vmatprep.subr.bf16.mxu0 0
        %1016 = vmatpush1.bf16.msra.mxu0 %v994
        %1017 = vmatprep.subr.bf16.mxu0 0
        %1018 = vmatpush1.bf16.msra.mxu0 %v995
        %1019 = vmatprep.subr.bf16.mxu0 0
        %1020 = vmatpush1.bf16.msra.mxu0 %v996
        %1021 = vmatprep.subr.bf16.mxu0 0
        %1022 = vmatpush1.bf16.msra.mxu0 0
        %1023 = vmatprep.subr.bf16.mxu0 0
        %1024 = vmatpush1.bf16.msra.mxu0 0
        %1025 = vmatprep.subr.bf16.mxu0 0
        %1026 = vmatpush1.bf16.msra.mxu0 0
        %1027 = vmatprep.subr.bf16.mxu0 0
        %1028 = vmatpush1.bf16.msra.mxu0 0
        %1029 = vmatprep.subr.bf16.mxu0 0
        %1030 = vmatpush1.bf16.msra.mxu0 0
        %1031 = vmatprep.subr.bf16.mxu0 0
        %1032 = vmatpush1.bf16.msra.mxu0 0
        %1033 = vmatprep.subr.bf16.mxu0 0
        %1034 = vmatpush1.bf16.msra.mxu0 0
        %1035 = vmatprep.subr.bf16.mxu0 0
        %1036 = vmatpush1.bf16.msra.mxu0 0
        %1037 = vmatprep.mubr.bf16.mxu0 0
        %1038 = vmatmul.mubr.bf16.gmra.mrb[0].mxu0 %v605
        %v1039 = vpop.f32.mrb[0].mxu0
        %v1040 = vadd.f32 %v955, %v1039
        %v1041 = vpop.f32.mrb[0].mxu0
        %v1042 = vpop.f32.mrb[0].mxu0
        %v1043 = vadd.f32 %v955, %v1042
        %v1044 = vpop.f32.mrb[0].mxu0
        %1045 = vmatprep.mubr.bf16.mxu0 0
        %1046 = vmatmul.mubr.bf16.gmra.mrb[0].mxu0 %v606
        %v1047 = vpop.f32.mrb[0].mxu0
        %v1048 = vadd.f32 %v955, %v1047
        %v1049 = vpop.f32.mrb[0].mxu0
        %v1050 = vpop.f32.mrb[0].mxu0
        %v1051 = vadd.f32 %v955, %v1050
        %v1052 = vpop.f32.mrb[0].mxu0
        %1053 = vmatprep.mubr.bf16.mxu0 0
        %1054 = vmatmul.mubr.bf16.gmra.mrb[0].mxu0 %v607
        %v1055 = vpop.f32.mrb[0].mxu0
        %v1056 = vadd.f32 %v955, %v1055
        %v1057 = vpop.f32.mrb[0].mxu0
        %v1058 = vpop.f32.mrb[0].mxu0
        %v1059 = vadd.f32 %v955, %v1058
        %v1060 = vpop.f32.mrb[0].mxu0
        %1061 = vmatprep.mubr.bf16.mxu0 0
        %1062 = vmatmul.mubr.bf16.gmra.mrb[0].mxu0 %v608
        %v1063 = vpop.f32.mrb[0].mxu0
        %v1064 = vadd.f32 %v955, %v1063
        %v1065 = vpop.f32.mrb[0].mxu0
        %v1066 = vpop.f32.mrb[0].mxu0
        %v1067 = vadd.f32 %v955, %v1066
        %v1068 = vpop.f32.mrb[0].mxu0
        %1069 = vmatprep.mubr.bf16.mxu0 0
        %1070 = vmatmul.mubr.bf16.gmra.mrb[0].mxu0 %v609
        %v1071 = vpop.f32.mrb[0].mxu0
        %v1072 = vadd.f32 %v955, %v1071
        %v1073 = vpop.f32.mrb[0].mxu0
        %v1074 = vpop.f32.mrb[0].mxu0
        %v1075 = vadd.f32 %v955, %v1074
        %v1076 = vpop.f32.mrb[0].mxu0
        %1077 = vmatprep.mubr.bf16.mxu0 0
        %1078 = vmatmul.mubr.bf16.gmra.mrb[0].mxu0 %v610
        %v1079 = vpop.f32.mrb[0].mxu0
        %v1080 = vadd.f32 %v955, %v1079
        %v1081 = vpop.f32.mrb[0].mxu0
        %v1082 = vpop.f32.mrb[0].mxu0
        %v1083 = vadd.f32 %v955, %v1082
        %v1084 = vpop.f32.mrb[0].mxu0
        %1085 = vmatprep.mubr.bf16.mxu0 0
        %1086 = vmatmul.mubr.bf16.gmra.mrb[0].mxu0 %v611
        %v1087 = vpop.f32.mrb[0].mxu0
        %v1088 = vadd.f32 %v955, %v1087
        %v1089 = vpop.f32.mrb[0].mxu0
        %v1090 = vpop.f32.mrb[0].mxu0
        %v1091 = vadd.f32 %v955, %v1090
        %v1092 = vpop.f32.mrb[0].mxu0
        %1093 = vmatprep.mubr.bf16.mxu0 0
        %1094 = vmatmul.mubr.bf16.gmra.mrb[0].mxu0 %v612
        %v1095 = vpop.f32.mrb[0].mxu0
        %v1096 = vadd.f32 %v955, %v1095
        %v1097 = vpop.f32.mrb[0].mxu0
        %v1098 = vpop.f32.mrb[0].mxu0
        %v1099 = vadd.f32 %v955, %v1098
        %v1100 = vpop.f32.mrb[0].mxu0
        %1101 = vdwg.mxu0
        %v1102 = vpack.c.bf16 %v707, %v704
        %v1103 = vpack.c.bf16 %v715, %v712
        %v1104 = vpack.c.bf16 %v723, %v720
        %v1105 = vpack.c.bf16 %v731, %v728
        %v1106 = vpack.c.bf16 %v739, %v736
        %v1107 = vpack.c.bf16 %v747, %v744
        %v1108 = vpack.c.bf16 %v755, %v752
        %v1109 = vpack.c.bf16 %v763, %v760
        %v1118 = vunpack.c.l.b16 %v1102
        %v1119 = vunpack.c.h.b16 %v1102
        %v1120 = vunpack.c.l.b16 %v1103
        %v1121 = vunpack.c.h.b16 %v1103
        %v1122 = vunpack.c.l.b16 %v1104
        %v1123 = vunpack.c.h.b16 %v1104
        %v1124 = vunpack.c.l.b16 %v1105
        %v1125 = vunpack.c.h.b16 %v1105
        %v1126 = vunpack.c.l.b16 %v1106
        %v1127 = vunpack.c.h.b16 %v1106
        %v1128 = vunpack.c.l.b16 %v1107
        %v1129 = vunpack.c.h.b16 %v1107
        %v1130 = vunpack.c.l.b16 %v1108
        %v1131 = vunpack.c.h.b16 %v1108
        %v1132 = vunpack.c.l.b16 %v1109
        %v1133 = vunpack.c.h.b16 %v1109
        %v1134 = vpack.c.b16 %v1118, %v1118
        %v1135 = vpack.c.b16 %v1119, %v1119
        %v1136 = vpack.c.b16 %v1120, %v1120
        %v1137 = vpack.c.b16 %v1121, %v1121
        %v1138 = vpack.c.b16 %v1122, %v1122
        %v1139 = vpack.c.b16 %v1123, %v1123
        %v1140 = vpack.c.b16 %v1124, %v1124
        %v1141 = vpack.c.b16 %v1125, %v1125
        %v1142 = vpack.c.b16 %v1126, %v1126
        %v1143 = vpack.c.b16 %v1127, %v1127
        %v1144 = vpack.c.b16 %v1128, %v1128
        %v1145 = vpack.c.b16 %v1129, %v1129
        %v1146 = vpack.c.b16 %v1130, %v1130
        %v1147 = vpack.c.b16 %v1131, %v1131
        %v1148 = vpack.c.b16 %v1132, %v1132
        %v1149 = vpack.c.b16 %v1133, %v1133
        %1166 = vst [vmem:[%s505] sm:$0xf] %v1134
        %1167 = vst [vmem:[%s505 + $0x4] sm:$0xf] %v1135
        %1168 = vst [vmem:[%s505 + $0x8] sm:$0xf] %v1136
        %1169 = vst [vmem:[%s505 + $0xc] sm:$0xf] %v1137
        %1170 = vst [vmem:[%s505 + $0x10] sm:$0xf] %v1138
        %1171 = vst [vmem:[%s505 + $0x14] sm:$0xf] %v1139
        %1172 = vst [vmem:[%s505 + $0x18] sm:$0xf] %v1140
        %1173 = vst [vmem:[%s505 + $0x1c] sm:$0xf] %v1141
        %1174 = vst [vmem:[%s505 + $0x20] sm:$0xf] %v1142
        %1175 = vst [vmem:[%s505 + $0x24] sm:$0xf] %v1143
        %1176 = vst [vmem:[%s505 + $0x28] sm:$0xf] %v1144
        %1177 = vst [vmem:[%s505 + $0x2c] sm:$0xf] %v1145
        %1178 = vst [vmem:[%s505 + $0x30] sm:$0xf] %v1146
        %1179 = vst [vmem:[%s505 + $0x34] sm:$0xf] %v1147
        %1180 = vst [vmem:[%s505 + $0x38] sm:$0xf] %v1148
        %1181 = vst [vmem:[%s505 + $0x3c] sm:$0xf] %v1149
        %v1182 = vpack.c.bf16 %v875, %v872
        %v1183 = vpack.c.bf16 %v883, %v880
        %v1184 = vpack.c.bf16 %v891, %v888
        %v1185 = vpack.c.bf16 %v899, %v896
        %v1186 = vpack.c.bf16 %v907, %v904
        %v1187 = vpack.c.bf16 %v915, %v912
        %v1188 = vpack.c.bf16 %v923, %v920
        %v1189 = vpack.c.bf16 %v931, %v928
        %v1198 = vunpack.c.l.b16 %v1182
        %v1199 = vunpack.c.h.b16 %v1182
        %v1200 = vunpack.c.l.b16 %v1183
        %v1201 = vunpack.c.h.b16 %v1183
        %v1202 = vunpack.c.l.b16 %v1184
        %v1203 = vunpack.c.h.b16 %v1184
        %v1204 = vunpack.c.l.b16 %v1185
        %v1205 = vunpack.c.h.b16 %v1185
        %v1206 = vunpack.c.l.b16 %v1186
        %v1207 = vunpack.c.h.b16 %v1186
        %v1208 = vunpack.c.l.b16 %v1187
        %v1209 = vunpack.c.h.b16 %v1187
        %v1210 = vunpack.c.l.b16 %v1188
        %v1211 = vunpack.c.h.b16 %v1188
        %v1212 = vunpack.c.l.b16 %v1189
        %v1213 = vunpack.c.h.b16 %v1189
        %v1214 = vpack.c.b16 %v1198, %v1198
        %v1215 = vpack.c.b16 %v1199, %v1199
        %v1216 = vpack.c.b16 %v1200, %v1200
        %v1217 = vpack.c.b16 %v1201, %v1201
        %v1218 = vpack.c.b16 %v1202, %v1202
        %v1219 = vpack.c.b16 %v1203, %v1203
        %v1220 = vpack.c.b16 %v1204, %v1204
        %v1221 = vpack.c.b16 %v1205, %v1205
        %v1222 = vpack.c.b16 %v1206, %v1206
        %v1223 = vpack.c.b16 %v1207, %v1207
        %v1224 = vpack.c.b16 %v1208, %v1208
        %v1225 = vpack.c.b16 %v1209, %v1209
        %v1226 = vpack.c.b16 %v1210, %v1210
        %v1227 = vpack.c.b16 %v1211, %v1211
        %v1228 = vpack.c.b16 %v1212, %v1212
        %v1229 = vpack.c.b16 %v1213, %v1213
        %1246 = vst [vmem:[%s512] sm:$0xf] %v1214
        %1247 = vst [vmem:[%s512 + $0x4] sm:$0xf] %v1215
        %1248 = vst [vmem:[%s512 + $0x8] sm:$0xf] %v1216
        %1249 = vst [vmem:[%s512 + $0xc] sm:$0xf] %v1217
        %1250 = vst [vmem:[%s512 + $0x10] sm:$0xf] %v1218
        %1251 = vst [vmem:[%s512 + $0x14] sm:$0xf] %v1219
        %1252 = vst [vmem:[%s512 + $0x18] sm:$0xf] %v1220
        %1253 = vst [vmem:[%s512 + $0x1c] sm:$0xf] %v1221
        %1254 = vst [vmem:[%s512 + $0x20] sm:$0xf] %v1222
        %1255 = vst [vmem:[%s512 + $0x24] sm:$0xf] %v1223
        %1256 = vst [vmem:[%s512 + $0x28] sm:$0xf] %v1224
        %1257 = vst [vmem:[%s512 + $0x2c] sm:$0xf] %v1225
        %1258 = vst [vmem:[%s512 + $0x30] sm:$0xf] %v1226
        %1259 = vst [vmem:[%s512 + $0x34] sm:$0xf] %v1227
        %1260 = vst [vmem:[%s512 + $0x38] sm:$0xf] %v1228
        %1261 = vst [vmem:[%s512 + $0x3c] sm:$0xf] %v1229
        %v1262 = vpack.c.bf16 %v1043, %v1040
        %v1263 = vpack.c.bf16 %v1051, %v1048
        %v1264 = vpack.c.bf16 %v1059, %v1056
        %v1265 = vpack.c.bf16 %v1067, %v1064
        %v1266 = vpack.c.bf16 %v1075, %v1072
        %v1267 = vpack.c.bf16 %v1083, %v1080
        %v1268 = vpack.c.bf16 %v1091, %v1088
        %v1269 = vpack.c.bf16 %v1099, %v1096
        %v1278 = vunpack.c.l.b16 %v1262
        %v1279 = vunpack.c.h.b16 %v1262
        %v1280 = vunpack.c.l.b16 %v1263
        %v1281 = vunpack.c.h.b16 %v1263
        %v1282 = vunpack.c.l.b16 %v1264
        %v1283 = vunpack.c.h.b16 %v1264
        %v1284 = vunpack.c.l.b16 %v1265
        %v1285 = vunpack.c.h.b16 %v1265
        %v1286 = vunpack.c.l.b16 %v1266
        %v1287 = vunpack.c.h.b16 %v1266
        %v1288 = vunpack.c.l.b16 %v1267
        %v1289 = vunpack.c.h.b16 %v1267
        %v1290 = vunpack.c.l.b16 %v1268
        %v1291 = vunpack.c.h.b16 %v1268
        %v1292 = vunpack.c.l.b16 %v1269
        %v1293 = vunpack.c.h.b16 %v1269
        %v1294 = vpack.c.b16 %v1278, %v1278
        %v1295 = vpack.c.b16 %v1279, %v1279
        %v1296 = vpack.c.b16 %v1280, %v1280
        %v1297 = vpack.c.b16 %v1281, %v1281
        %v1298 = vpack.c.b16 %v1282, %v1282
        %v1299 = vpack.c.b16 %v1283, %v1283
        %v1300 = vpack.c.b16 %v1284, %v1284
        %v1301 = vpack.c.b16 %v1285, %v1285
        %v1302 = vpack.c.b16 %v1286, %v1286
        %v1303 = vpack.c.b16 %v1287, %v1287
        %v1304 = vpack.c.b16 %v1288, %v1288
        %v1305 = vpack.c.b16 %v1289, %v1289
        %v1306 = vpack.c.b16 %v1290, %v1290
        %v1307 = vpack.c.b16 %v1291, %v1291
        %v1308 = vpack.c.b16 %v1292, %v1292
        %v1309 = vpack.c.b16 %v1293, %v1293
        %1326 = vst [vmem:[%s519] sm:$0xf] %v1294
        %1327 = vst [vmem:[%s519 + $0x4] sm:$0xf] %v1295
        %1328 = vst [vmem:[%s519 + $0x8] sm:$0xf] %v1296
        %1329 = vst [vmem:[%s519 + $0xc] sm:$0xf] %v1297
        %1330 = vst [vmem:[%s519 + $0x10] sm:$0xf] %v1298
        %1331 = vst [vmem:[%s519 + $0x14] sm:$0xf] %v1299
        %1332 = vst [vmem:[%s519 + $0x18] sm:$0xf] %v1300
        %1333 = vst [vmem:[%s519 + $0x1c] sm:$0xf] %v1301
        %1334 = vst [vmem:[%s519 + $0x20] sm:$0xf] %v1302
        %1335 = vst [vmem:[%s519 + $0x24] sm:$0xf] %v1303
        %1336 = vst [vmem:[%s519 + $0x28] sm:$0xf] %v1304
        %1337 = vst [vmem:[%s519 + $0x2c] sm:$0xf] %v1305
        %1338 = vst [vmem:[%s519 + $0x30] sm:$0xf] %v1306
        %1339 = vst [vmem:[%s519 + $0x34] sm:$0xf] %v1307
        %1340 = vst [vmem:[%s519 + $0x38] sm:$0xf] %v1308
        %1341 = vst [vmem:[%s519 + $0x3c] sm:$0xf] %v1309
        %s1342 = sand.u32 %s238, 1
        %s1343 = scalar_lea.sflag [#allocation4], %s1342
        %s1344 = sand.u32 %s238, 1
        %s1345 = smul.addr %s1344, 64
        %s1346 = scalar_lea.vmem [#allocation10], %s1345
        %s1347 = sand.u32 %s34, 1
        %s1348 = scalar_lea.sflag [#allocation12], %s1347
        %s1349 = sand.u32 %s266, 1
        %s1350 = smul.addr %s1349, 64
        %s1351 = scalar_lea.vmem [#allocation11], %s1350
        %s1352 = sand.u32 %s34, 1
        %s1353 = scalar_lea.sflag [#allocation12], %s1352
        %s1354 = sand.u32 %s294, 1
        %s1355 = smul.addr %s1354, 64
        %s1356 = scalar_lea.vmem [#allocation13], %s1355
        // Predicated region
        $region65: #{tpu_custom_call.1} parent=47 // pred_check
          %p1357 = pneg %p248
        $region66: #{tpu_custom_call.1} parent=47 // pred_check_branch
          %1359 = sbr.rel (%p1357) target = $region68
        $region67: #{tpu_custom_call.1} parent=47 // pred_region
          %s1360 = smul.u32 16, %s38
          %s1362 = ssub.s32 1024, 1024
          %1363 = vsyncadd %s1343, %s1362
          %s1364 = smul.addr %s39, 16
          %s1365 = sadd.s32 %s1360, %s1364
          %s1366 = smul.addr %s1365, 64
          %s1367 = scalar_lea.hbm %s7, %s1366
          %s1368 = sshll.u32 %s1346, 4
          %s1369 = int_to_ptr.vmem [resolvable:$true] %s1368
          %1374 = dma.vmem_to_hbm [thread:$0]  %s1369, 1024, %s1367, %s1343, 64, 64, 4
        $region68: #{tpu_custom_call.1} parent=47 // pred_fallthru
          _
        // Predicated region
        $region69: #{tpu_custom_call.1} parent=47 // pred_check
          %p1375 = pneg %p276
        $region70: #{tpu_custom_call.1} parent=47 // pred_check_branch
          %1377 = sbr.rel (%p1375) target = $region72
        $region71: #{tpu_custom_call.1} parent=47 // pred_region
          %s1378 = smul.u32 16, %s38
          %s1380 = ssub.s32 1024, 1024
          %1381 = vsyncadd %s1348, %s1380
          %s1382 = smul.addr %s39, 16
          %s1383 = sadd.s32 %s1378, %s1382
          %s1384 = smul.addr %s1383, 64
          %s1385 = scalar_lea.hbm %s8, %s1384
          %s1386 = sshll.u32 %s1351, 4
          %s1387 = int_to_ptr.vmem [resolvable:$true] %s1386
          %1392 = dma.vmem_to_hbm [thread:$0]  %s1387, 1024, %s1385, %s1348, 64, 64, 4
        $region72: #{tpu_custom_call.1} parent=47 // pred_fallthru
          _
        // Predicated region
        $region73: #{tpu_custom_call.1} parent=47 // pred_check
          %p1393 = pneg %p304
        $region74: #{tpu_custom_call.1} parent=47 // pred_check_branch
          %1395 = sbr.rel (%p1393) target = $region76
        $region75: #{tpu_custom_call.1} parent=47 // pred_region
          %s1396 = smul.u32 16, %s38
          %s1398 = ssub.s32 1024, 1024
          %1399 = vsyncadd %s1353, %s1398
          %s1400 = smul.addr %s39, 16
          %s1401 = sadd.s32 %s1396, %s1400
          %s1402 = smul.addr %s1401, 64
          %s1403 = scalar_lea.hbm %s9, %s1402
          %s1404 = sshll.u32 %s1356, 4
          %s1405 = int_to_ptr.vmem [resolvable:$true] %s1404
          %1410 = dma.vmem_to_hbm [thread:$0]  %s1405, 1024, %s1403, %s1353, 64, 64, 4
        $region76: #{tpu_custom_call.1} parent=47 // pred_fallthru
          _
      $region48: #{tpu_custom_call.1} parent=5 // pred_fallthru
        _
      %p1411 = scmp.le.s32.totalorder 2, %s29
      // Predicated region
      $region77: #{tpu_custom_call.1} parent=5 // pred_check
        %p1412 = pneg %p1411
      $region78: #{tpu_custom_call.1} parent=5 // pred_check_branch
        %1414 = sbr.rel (%p1412) target = $region80
      $region79: #{tpu_custom_call.1} parent=5 // pred_region
        %s1415 = ssub.s32 %s29, 2
        // Predicated region
        $region81: #{tpu_custom_call.1} parent=79 // pred_check
          %p1416 = pneg %p254
        $region82: #{tpu_custom_call.1} parent=79 // pred_check_branch
          %1418 = sbr.rel (%p1416) target = $region84
        $region83: #{tpu_custom_call.1} parent=79 // pred_region
          %s1419 = sand.u32 %s239, 1
          %s1420 = scalar_lea.sflag [#allocation4], %s1419
          %s1421 = sand.u32 %s239, 1
          %s1422 = smul.addr %s1421, 64
          %s1423 = scalar_lea.vmem [#allocation10], %s1422
          %1424 = dma.done %s1420, 1024
        $region84: #{tpu_custom_call.1} parent=79 // pred_fallthru
          _
        // Predicated region
        $region85: #{tpu_custom_call.1} parent=79 // pred_check
          %p1425 = pneg %p282
        $region86: #{tpu_custom_call.1} parent=79 // pred_check_branch
          %1427 = sbr.rel (%p1425) target = $region88
        $region87: #{tpu_custom_call.1} parent=79 // pred_region
          %s1428 = sand.u32 %s35, 1
          %s1429 = scalar_lea.sflag [#allocation12], %s1428
          %s1430 = sand.u32 %s267, 1
          %s1431 = smul.addr %s1430, 64
          %s1432 = scalar_lea.vmem [#allocation11], %s1431
          %1433 = dma.done %s1429, 1024
        $region88: #{tpu_custom_call.1} parent=79 // pred_fallthru
          _
        // Predicated region
        $region89: #{tpu_custom_call.1} parent=79 // pred_check
          %p1434 = pneg %p310
        $region90: #{tpu_custom_call.1} parent=79 // pred_check_branch
          %1436 = sbr.rel (%p1434) target = $region92
        $region91: #{tpu_custom_call.1} parent=79 // pred_region
          %s1437 = sand.u32 %s35, 1
          %s1438 = scalar_lea.sflag [#allocation12], %s1437
          %s1439 = sand.u32 %s295, 1
          %s1440 = smul.addr %s1439, 64
          %s1441 = scalar_lea.vmem [#allocation13], %s1440
          %1442 = dma.done %s1438, 1024
        $region92: #{tpu_custom_call.1} parent=79 // pred_fallthru
          _
      $region80: #{tpu_custom_call.1} parent=5 // pred_fallthru
        _
    $region6: #{tpu_custom_call.1} parent=1 // loop_footer
      %s33 = sadd.s32 1, %s29
    $region7: #{tpu_custom_call.1} parent=1 // loop_footer_branch
      %28 = sbr.rel target = $region3
    $region8: #{tpu_custom_call.1} parent=1 // loop_exit
      _
    %1443 = vsyncpa [#allocation3], 1
    %s1444 = scalar_lea.sflag [#allocation3], 1
    %1445 = vsyncpa %s1444, 1
    %1446 = vsyncpa [#allocation6], 1
    %s1447 = scalar_lea.sflag [#allocation6], 1
    %1448 = vsyncpa %s1447, 1
    %1449 = vsyncpa [#allocation9], 1
    %s1450 = scalar_lea.sflag [#allocation9], 1
    %1451 = vsyncpa %s1450, 1
    %1452 = vsyncpa [#allocation4], 1
    %s1453 = scalar_lea.sflag [#allocation4], 1
    %1454 = vsyncpa %s1453, 1
    %1455 = vsyncpa [#allocation12], 1
    %s1456 = scalar_lea.sflag [#allocation12], 1
    %1457 = vsyncpa %s1456, 1

</llo_original>
